<compile_context>
chip_gen: v7x
topology: tpu7x:2x2x1
jax: 0.10.0
libtpu: 0.0.40
codegen_flags: <defaults>
</compile_context>

<pallas_src>
import jax
import jax.numpy as jnp
from jax import lax
from jax.experimental import pallas as pl
from jax.experimental.pallas import tpu as pltpu


def _largest_divisor_leq(n, m):
    for d in range(min(n, m), 0, -1):
        if n % d == 0:
            return d
    return 1


# ----------------------------------------------------------------------------
# Fused bidirectional LSTM recurrence (input gates precomputed outside).
# One grid step = Tc forward timesteps AND the mirrored Tc backward timesteps.
# ----------------------------------------------------------------------------
def _bilstm_chunk_kernel(gxf_ref, gxb_ref, whhf_ref, whhb_ref,
                         outf_ref, outb_ref, hf_sc, cf_sc, hb_sc, cb_sc):
    ci = pl.program_id(0)
    Tc = gxf_ref.shape[0]
    H = whhf_ref.shape[0]

    @pl.when(ci == 0)
    def _():
        hf_sc[...] = jnp.zeros_like(hf_sc)
        cf_sc[...] = jnp.zeros_like(cf_sc)
        hb_sc[...] = jnp.zeros_like(hb_sc)
        cb_sc[...] = jnp.zeros_like(cb_sc)

    whh_f = whhf_ref[...]          # (H, 4H) bf16, resident across the whole grid
    whh_b = whhb_ref[...]

    def cell(gates, c):            # gates: (B, 4H) f32, PyTorch order i, f, g, o
        i = jax.nn.sigmoid(gates[:, 0 * H:1 * H])
        f = jax.nn.sigmoid(gates[:, 1 * H:2 * H])
        g = jnp.tanh(gates[:, 2 * H:3 * H])
        o = jax.nn.sigmoid(gates[:, 3 * H:4 * H])
        c_new = f * c + i * g
        h_new = o * jnp.tanh(c_new)
        return h_new, c_new

    def body(j, carry):
        hf, cf, hb, cb = carry
        # Only the recurrent matmul lives on the serial path (bf16 x bf16 -> f32).
        gates_f = gxf_ref[j] + jnp.dot(hf.astype(whh_f.dtype), whh_f,
                                       preferred_element_type=jnp.float32)
        gates_b = gxb_ref[Tc - 1 - j] + jnp.dot(hb.astype(whh_b.dtype), whh_b,
                                                preferred_element_type=jnp.float32)
        hf, cf = cell(gates_f, cf)
        hb, cb = cell(gates_b, cb)
        outf_ref[j] = hf.astype(outf_ref.dtype)
        outb_ref[Tc - 1 - j] = hb.astype(outb_ref.dtype)
        return hf, cf, hb, cb

    carry0 = (hf_sc[...], cf_sc[...], hb_sc[...], cb_sc[...])
    hf, cf, hb, cb = lax.fori_loop(0, Tc, body, carry0, unroll=True)
    hf_sc[...] = hf
    cf_sc[...] = cf
    hb_sc[...] = hb
    cb_sc[...] = cb


def bilstm_layer(gx_f, gx_b, w_hh_f_t, w_hh_b_t, *, tc_max=32):
    """gx_*: (T, B, 4H) f32 precomputed input gates; w_hh_*_t: (H, 4H) bf16.

    Returns (h_fwd, h_bwd), each (T, B, H) f32, both in forward time order.
    """
    T, B, G = gx_f.shape
    H = w_hh_f_t.shape[0]
    Tc = _largest_divisor_leq(T, tc_max)
    NC = T // Tc

    return pl.pallas_call(
        _bilstm_chunk_kernel,
        grid=(NC,),
        in_specs=[
            pl.BlockSpec((Tc, B, G), lambda ci: (ci, 0, 0)),             # fwd gates, chunk ci
            pl.BlockSpec((Tc, B, G), lambda ci: (NC - 1 - ci, 0, 0)),    # bwd gates, mirrored chunk
            pl.BlockSpec((H, G), lambda ci: (0, 0)),                     # resident recurrent weights
            pl.BlockSpec((H, G), lambda ci: (0, 0)),
        ],
        out_specs=(
            pl.BlockSpec((Tc, B, H), lambda ci: (ci, 0, 0)),
            pl.BlockSpec((Tc, B, H), lambda ci: (NC - 1 - ci, 0, 0)),
        ),
        out_shape=(
            jax.ShapeDtypeStruct((T, B, H), jnp.float32),
            jax.ShapeDtypeStruct((T, B, H), jnp.float32),
        ),
        scratch_shapes=[
            pltpu.VMEM((B, H), jnp.float32),   # h_fwd
            pltpu.VMEM((B, H), jnp.float32),   # c_fwd
            pltpu.VMEM((B, H), jnp.float32),   # h_bwd
            pltpu.VMEM((B, H), jnp.float32),   # c_bwd
        ],
        compiler_params=pltpu.CompilerParams(
            dimension_semantics=("arbitrary",)),   # recurrence is strictly sequential
    )(gx_f, gx_b, w_hh_f_t, w_hh_b_t)


# ----------------------------------------------------------------------------
# Attention over time + final Linear, fused; tiled over batch.
# Inputs stay TIME-MAJOR (T, B, H) -> no HBM transposes between LSTM and attention.
# ----------------------------------------------------------------------------
def _attn_fc_kernel(hf_ref, hb_ref, wf_ref, wb_ref, wff_ref, wfb_ref, bfc_ref,
                    out_ref):
    hf = hf_ref[...]                                       # (T, Bt, H) f32
    hb = hb_ref[...]
    # attention scores: Linear(2H -> 1, bias=False), split over direction halves
    scores = (jnp.sum(hf * wf_ref[...], axis=-1, keepdims=True)
              + jnp.sum(hb * wb_ref[...], axis=-1, keepdims=True))   # (T, Bt, 1)
    # softmax over the time axis (dim=1 in PyTorch), max-stabilized
    m = jnp.max(scores, axis=0, keepdims=True)
    e = jnp.exp(scores - m)
    w = e * pl.reciprocal(jnp.sum(e, axis=0, keepdims=True), approx=True)
    # context vector: weighted sum over time; leading-axis reduce = cheap VPU adds
    ctx_f = jnp.sum(w * hf, axis=0)                        # (Bt, H)
    ctx_b = jnp.sum(w * hb, axis=0)
    # final fully connected layer (output lane-padded to 128)
    out_ref[...] = (jnp.dot(ctx_f.astype(wff_ref.dtype), wff_ref[...],
                            preferred_element_type=jnp.float32)
                    + jnp.dot(ctx_b.astype(wfb_ref.dtype), wfb_ref[...],
                              preferred_element_type=jnp.float32)
                    + bfc_ref[...])


def attention_fc(hf_tbd, hb_tbd, w_att_f, w_att_b, w_fc_f, w_fc_b, b_fc_p):
    # TODO(synk): for very long T, stream the time axis with an online softmax
    # instead of loading the whole (T, Bt, H) slab per batch tile.
    T, B, H = hf_tbd.shape
    Cp = w_fc_f.shape[-1]
    # Batch tile must be a multiple of 8 or the full batch (sublane constraint).
    Bt = 8 if (B % 8 == 0 and B > 8) else B
    return pl.pallas_call(
        _attn_fc_kernel,
        grid=(B // Bt,),
        in_specs=[
            pl.BlockSpec((T, Bt, H), lambda b: (0, b, 0)),
            pl.BlockSpec((T, Bt, H), lambda b: (0, b, 0)),
            pl.BlockSpec((1, 1, H), lambda b: (0, 0, 0)),
            pl.BlockSpec((1, 1, H), lambda b: (0, 0, 0)),
            pl.BlockSpec((H, Cp), lambda b: (0, 0)),
            pl.BlockSpec((H, Cp), lambda b: (0, 0)),
            pl.BlockSpec((1, Cp), lambda b: (0, 0)),
        ],
        out_specs=pl.BlockSpec((Bt, Cp), lambda b: (b, 0)),
        out_shape=jax.ShapeDtypeStruct((B, Cp), jnp.float32),
        compiler_params=pltpu.CompilerParams(dimension_semantics=("parallel",)),
    )(hf_tbd, hb_tbd, w_att_f, w_att_b, w_fc_f, w_fc_b, b_fc_p)


# ----------------------------------------------------------------------------
# Input-projection precompute (plain XLA, fully parallel over T*B).
# ----------------------------------------------------------------------------
def _proj_from_input(x_tbi, w_ih_t, bias):
    T, B, In = x_tbi.shape
    g = jnp.dot(x_tbi.reshape(T * B, In).astype(w_ih_t.dtype), w_ih_t,
                preferred_element_type=jnp.float32)
    return g.reshape(T, B, -1) + bias


def _proj_from_halves(hf, hb, w_ih_t, bias):
    # Previous layer's output kept as separate direction halves (no HBM concat).
    T, B, H = hf.shape
    wf, wb = w_ih_t[:H], w_ih_t[H:]
    gf = jnp.dot(hf.reshape(T * B, H).astype(wf.dtype), wf,
                 preferred_element_type=jnp.float32)
    gb = jnp.dot(hb.reshape(T * B, H).astype(wb.dtype), wb,
                 preferred_element_type=jnp.float32)
    return (gf + gb).reshape(T, B, -1) + bias


# ----------------------------------------------------------------------------
# Full module forward.
# ----------------------------------------------------------------------------
def lstm_with_attention_forward(x, params, num_classes):
    # TODO(synk): optional attention `mask` argument is not exercised (mask=None path).
    x_tbi = jnp.transpose(x, (1, 0, 2))                    # (T, B, In) time-major
    hf = hb = None
    for layer_idx, layer in enumerate(params["lstm"]):
        if layer_idx == 0:
            gx_f = _proj_from_input(x_tbi, layer["fwd"]["w_ih_t"], layer["fwd"]["bias"])
            gx_b = _proj_from_input(x_tbi, layer["bwd"]["w_ih_t"], layer["bwd"]["bias"])
        else:
            gx_f = _proj_from_halves(hf, hb, layer["fwd"]["w_ih_t"], layer["fwd"]["bias"])
            gx_b = _proj_from_halves(hf, hb, layer["bwd"]["w_ih_t"], layer["bwd"]["bias"])
        hf, hb = bilstm_layer(gx_f, gx_b, layer["fwd"]["w_hh_t"], layer["bwd"]["w_hh_t"])
        # nn.LSTM inter-layer dropout is inactive in eval(): identity.

    # nn.Dropout on the context is inactive in eval(): identity.
    out_p = attention_fc(hf, hb,
                         params["w_att_f"], params["w_att_b"],
                         params["w_fc_f"], params["w_fc_b"], params["b_fc_p"])
    return out_p[:, :num_classes]


# ----------------------------------------------------------------------------
# Deterministic parameter initialization (PyTorch-like shapes / gate order).
# ----------------------------------------------------------------------------
def init_params(key, input_size, hidden_size, num_layers, num_classes,
                bidirectional=True, matmul_dtype=jnp.bfloat16):
    # TODO(synk): only the bidirectional=True configuration (module default) is
    # implemented by the fused two-direction kernel.
    assert bidirectional, "fused kernel implements bidirectional=True only"
    H = hidden_size
    D = 2 * H
    k_lstm = 1.0 / (H ** 0.5)
    k_lin = 1.0 / (D ** 0.5)

    params = {"lstm": []}
    for layer_idx in range(num_layers):
        in_l = input_size if layer_idx == 0 else D
        layer = {}
        for dname in ("fwd", "bwd"):
            key, k1, k2, k3, k4 = jax.random.split(key, 5)
            w_ih = jax.random.uniform(k1, (4 * H, in_l), jnp.float32, -k_lstm, k_lstm)
            w_hh = jax.random.uniform(k2, (4 * H, H), jnp.float32, -k_lstm, k_lstm)
            b_ih = jax.random.uniform(k3, (4 * H,), jnp.float32, -k_lstm, k_lstm)
            b_hh = jax.random.uniform(k4, (4 * H,), jnp.float32, -k_lstm, k_lstm)
            layer[dname] = {
                "w_ih_t": w_ih.T.astype(matmul_dtype),          # (in_l, 4H)
                "w_hh_t": w_hh.T.astype(matmul_dtype),          # (H, 4H)
                "bias": (b_ih + b_hh).reshape(1, 1, 4 * H),     # folded biases, f32
            }
        params["lstm"].append(layer)

    key, ka, kf, kb = jax.random.split(key, 4)
    w_att = jax.random.uniform(ka, (D,), jnp.float32, -k_lin, k_lin)
    w_fc = jax.random.uniform(kf, (num_classes, D), jnp.float32, -k_lin, k_lin)
    b_fc = jax.random.uniform(kb, (num_classes,), jnp.float32, -k_lin, k_lin)

    c_pad = 128 * pl.cdiv(num_classes, 128)                 # lane-dense FC output width
    w_fc_t = jnp.zeros((D, c_pad), jnp.float32).at[:, :num_classes].set(w_fc.T)
    params["w_att_f"] = w_att[:H].reshape(1, 1, H)
    params["w_att_b"] = w_att[H:].reshape(1, 1, H)
    params["w_fc_f"] = w_fc_t[:H].astype(matmul_dtype)
    params["w_fc_b"] = w_fc_t[H:].astype(matmul_dtype)
    params["b_fc_p"] = jnp.zeros((1, c_pad), jnp.float32).at[0, :num_classes].set(b_fc)
    return params


if __name__ == "__main__":
    B, T, input_size = 2, 8, 4
    hidden_size, num_layers, num_classes = 32, 2, 1
    bidirectional = True

    key = jax.random.PRNGKey(0)
    pkey, xkey = jax.random.split(key)
    params = init_params(pkey, input_size, hidden_size, num_layers,
                         num_classes, bidirectional)
    x = jax.random.normal(xkey, (B, T, input_size), jnp.float32)

    forward = jax.jit(lambda xx: lstm_with_attention_forward(xx, params, num_classes))
    out = jax.block_until_ready(forward(x))

    assert out.shape == (B, num_classes)
    assert bool(jnp.all(jnp.isfinite(out)))
    print("KERNEL_OK")
</pallas_src>

<mosaic_0001>
module attributes {stable_mosaic.version = 11 : i64} {
  func.func @_attn_fc_kernel(%arg0: i32, %arg1: memref<8x2x32xf32, #tpu.memory_space<vmem>>, %arg2: memref<8x2x32xf32, #tpu.memory_space<vmem>>, %arg3: memref<1x1x32xf32, #tpu.memory_space<vmem>>, %arg4: memref<1x1x32xf32, #tpu.memory_space<vmem>>, %arg5: memref<32x128xbf16, #tpu.memory_space<vmem>>, %arg6: memref<32x128xbf16, #tpu.memory_space<vmem>>, %arg7: memref<1x128xf32, #tpu.memory_space<vmem>>, %arg8: memref<2x128xf32, #tpu.memory_space<vmem>>) attributes {dimension_semantics = [#tpu.dimension_semantics<parallel>], iteration_bounds = array<i64: 1>, scalar_prefetch = 0 : i64, scratch_operands = 0 : i64, tpu.core_type = #tpu.core_type<tc>, window_params = [{transform_indices = @transform_0, window_bounds = array<i64: 8, 2, 32>}, {transform_indices = @transform_1, window_bounds = array<i64: 8, 2, 32>}, {pipeline_mode = #tpu.pipeline_mode<synchronous>, transform_indices = @transform_2, window_bounds = array<i64: 1, 1, 32>}, {pipeline_mode = #tpu.pipeline_mode<synchronous>, transform_indices = @transform_3, window_bounds = array<i64: 1, 1, 32>}, {pipeline_mode = #tpu.pipeline_mode<synchronous>, transform_indices = @transform_4, window_bounds = array<i64: 32, 128>}, {pipeline_mode = #tpu.pipeline_mode<synchronous>, transform_indices = @transform_5, window_bounds = array<i64: 32, 128>}, {pipeline_mode = #tpu.pipeline_mode<synchronous>, transform_indices = @transform_6, window_bounds = array<i64: 1, 128>}, {transform_indices = @transform_7, window_bounds = array<i64: 2, 128>}]} {
    %c0 = arith.constant 0 : index
    %c0_0 = arith.constant 0 : index
    %c0_1 = arith.constant 0 : index
    %0 = vector.load %arg1[%c0, %c0_0, %c0_1] : memref<8x2x32xf32, #tpu.memory_space<vmem>>, vector<8x2x32xf32>
    %c0_2 = arith.constant 0 : index
    %c0_3 = arith.constant 0 : index
    %c0_4 = arith.constant 0 : index
    %1 = vector.load %arg2[%c0_2, %c0_3, %c0_4] : memref<8x2x32xf32, #tpu.memory_space<vmem>>, vector<8x2x32xf32>
    %c0_5 = arith.constant 0 : index
    %c0_6 = arith.constant 0 : index
    %c0_7 = arith.constant 0 : index
    %2 = vector.load %arg3[%c0_5, %c0_6, %c0_7] : memref<1x1x32xf32, #tpu.memory_space<vmem>>, vector<1x1x32xf32>
    %3 = vector.broadcast %2 : vector<1x1x32xf32> to vector<8x2x32xf32>
    %4 = arith.mulf %0, %3 : vector<8x2x32xf32>
    %cst = arith.constant dense<0.000000e+00> : vector<8x2xf32>
    %5 = vector.multi_reduction <add>, %4, %cst [2] : vector<8x2x32xf32> to vector<8x2xf32>
    %6 = vector.shape_cast %5 : vector<8x2xf32> to vector<8x2x1xf32>
    %c0_8 = arith.constant 0 : index
    %c0_9 = arith.constant 0 : index
    %c0_10 = arith.constant 0 : index
    %7 = vector.load %arg4[%c0_8, %c0_9, %c0_10] : memref<1x1x32xf32, #tpu.memory_space<vmem>>, vector<1x1x32xf32>
    %8 = vector.broadcast %7 : vector<1x1x32xf32> to vector<8x2x32xf32>
    %9 = arith.mulf %1, %8 : vector<8x2x32xf32>
    %cst_11 = arith.constant dense<0.000000e+00> : vector<8x2xf32>
    %10 = vector.multi_reduction <add>, %9, %cst_11 [2] : vector<8x2x32xf32> to vector<8x2xf32>
    %11 = vector.shape_cast %10 : vector<8x2xf32> to vector<8x2x1xf32>
    %12 = arith.addf %6, %11 : vector<8x2x1xf32>
    %cst_12 = arith.constant dense<0xFF800000> : vector<2x1xf32>
    %13 = vector.multi_reduction <maximumf>, %12, %cst_12 [0] : vector<8x2x1xf32> to vector<2x1xf32>
    %14 = vector.shape_cast %13 : vector<2x1xf32> to vector<1x2x1xf32>
    %15 = vector.broadcast %14 : vector<1x2x1xf32> to vector<8x2x1xf32>
    %16 = arith.subf %12, %15 : vector<8x2x1xf32>
    %17 = math.exp %16 : vector<8x2x1xf32>
    %cst_13 = arith.constant dense<0.000000e+00> : vector<2x1xf32>
    %18 = vector.multi_reduction <add>, %17, %cst_13 [0] : vector<8x2x1xf32> to vector<2x1xf32>
    %19 = vector.shape_cast %18 : vector<2x1xf32> to vector<1x2x1xf32>
    %20 = tpu.reciprocal %19 {approx = true} : vector<1x2x1xf32> -> vector<1x2x1xf32>
    %21 = vector.broadcast %20 : vector<1x2x1xf32> to vector<8x2x1xf32>
    %22 = arith.mulf %17, %21 : vector<8x2x1xf32>
    %23 = vector.broadcast %22 : vector<8x2x1xf32> to vector<8x2x32xf32>
    %24 = arith.mulf %23, %0 : vector<8x2x32xf32>
    %cst_14 = arith.constant dense<0.000000e+00> : vector<2x32xf32>
    %25 = vector.multi_reduction <add>, %24, %cst_14 [0] : vector<8x2x32xf32> to vector<2x32xf32>
    %26 = vector.broadcast %22 : vector<8x2x1xf32> to vector<8x2x32xf32>
    %27 = arith.mulf %26, %1 : vector<8x2x32xf32>
    %cst_15 = arith.constant dense<0.000000e+00> : vector<2x32xf32>
    %28 = vector.multi_reduction <add>, %27, %cst_15 [0] : vector<8x2x32xf32> to vector<2x32xf32>
    %29 = arith.truncf %25 : vector<2x32xf32> to vector<2x32xbf16>
    %c0_16 = arith.constant 0 : index
    %c0_17 = arith.constant 0 : index
    %30 = vector.load %arg5[%c0_16, %c0_17] : memref<32x128xbf16, #tpu.memory_space<vmem>>, vector<32x128xbf16>
    %cst_18 = arith.constant dense<0.000000e+00> : vector<2x128xf32>
    %31 = tpu.matmul %29, %30, %cst_18 {dimension_numbers = #tpu.dot_dimension_numbers<[1], [0], [0], [1], [0, 0, 1, 1], [], []>} : vector<2x32xbf16>, vector<32x128xbf16>, vector<2x128xf32> -> vector<2x128xf32>
    %32 = arith.truncf %28 : vector<2x32xf32> to vector<2x32xbf16>
    %c0_19 = arith.constant 0 : index
    %c0_20 = arith.constant 0 : index
    %33 = vector.load %arg6[%c0_19, %c0_20] : memref<32x128xbf16, #tpu.memory_space<vmem>>, vector<32x128xbf16>
    %cst_21 = arith.constant dense<0.000000e+00> : vector<2x128xf32>
    %34 = tpu.matmul %32, %33, %cst_21 {dimension_numbers = #tpu.dot_dimension_numbers<[1], [0], [0], [1], [0, 0, 1, 1], [], []>} : vector<2x32xbf16>, vector<32x128xbf16>, vector<2x128xf32> -> vector<2x128xf32>
    %35 = arith.addf %31, %34 : vector<2x128xf32>
    %c0_22 = arith.constant 0 : index
    %c0_23 = arith.constant 0 : index
    %36 = vector.load %arg7[%c0_22, %c0_23] : memref<1x128xf32, #tpu.memory_space<vmem>>, vector<1x128xf32>
    %37 = vector.broadcast %36 : vector<1x128xf32> to vector<2x128xf32>
    %38 = arith.addf %35, %37 : vector<2x128xf32>
    %c0_24 = arith.constant 0 : index
    %c0_25 = arith.constant 0 : index
    %39 = vector.load %arg8[%c0_24, %c0_25] : memref<2x128xf32, #tpu.memory_space<vmem>>, vector<2x128xf32>
    tpu.vector_store %arg8[%c0_24, %c0_25], %38 {strides = array<i32>} : memref<2x128xf32, #tpu.memory_space<vmem>>, vector<2x128xf32>,
    return
  }
  func.func @transform_0(%arg0: i32) -> (i32, i32, i32) {
    %c0_i32 = arith.constant 0 : i32
    %c0_i32_0 = arith.constant 0 : i32
    %c0_i32_1 = arith.constant 0 : i32
    return %c0_i32, %arg0, %c0_i32_0 : i32, i32, i32
  }
  func.func @transform_1(%arg0: i32) -> (i32, i32, i32) {
    %c0_i32 = arith.constant 0 : i32
    %c0_i32_0 = arith.constant 0 : i32
    %c0_i32_1 = arith.constant 0 : i32
    return %c0_i32, %arg0, %c0_i32_0 : i32, i32, i32
  }
  func.func @transform_2(%arg0: i32) -> (i32, i32, i32) {
    %c0_i32 = arith.constant 0 : i32
    %c0_i32_0 = arith.constant 0 : i32
    %c0_i32_1 = arith.constant 0 : i32
    %c0_i32_2 = arith.constant 0 : i32
    return %c0_i32, %c0_i32_0, %c0_i32_1 : i32, i32, i32
  }
  func.func @transform_3(%arg0: i32) -> (i32, i32, i32) {
    %c0_i32 = arith.constant 0 : i32
    %c0_i32_0 = arith.constant 0 : i32
    %c0_i32_1 = arith.constant 0 : i32
    %c0_i32_2 = arith.constant 0 : i32
    return %c0_i32, %c0_i32_0, %c0_i32_1 : i32, i32, i32
  }
  func.func @transform_4(%arg0: i32) -> (i32, i32) {
    %c0_i32 = arith.constant 0 : i32
    %c0_i32_0 = arith.constant 0 : i32
    %c0_i32_1 = arith.constant 0 : i32
    return %c0_i32, %c0_i32_0 : i32, i32
  }
  func.func @transform_5(%arg0: i32) -> (i32, i32) {
    %c0_i32 = arith.constant 0 : i32
    %c0_i32_0 = arith.constant 0 : i32
    %c0_i32_1 = arith.constant 0 : i32
    return %c0_i32, %c0_i32_0 : i32, i32
  }
  func.func @transform_6(%arg0: i32) -> (i32, i32) {
    %c0_i32 = arith.constant 0 : i32
    %c0_i32_0 = arith.constant 0 : i32
    %c0_i32_1 = arith.constant 0 : i32
    return %c0_i32, %c0_i32_0 : i32, i32
  }
  func.func @transform_7(%arg0: i32) -> (i32, i32) {
    %c0_i32 = arith.constant 0 : i32
    %c0_i32_0 = arith.constant 0 : i32
    return %arg0, %c0_i32 : i32, i32
  }
}

module attributes {stable_mosaic.version = 11 : i64} {
  func.func @_bilstm_chunk_kernel(%arg0: i32, %arg1: memref<8x2x128xf32, #tpu.memory_space<vmem>>, %arg2: memref<8x2x128xf32, #tpu.memory_space<vmem>>, %arg3: memref<32x128xbf16, #tpu.memory_space<vmem>>, %arg4: memref<32x128xbf16, #tpu.memory_space<vmem>>, %arg5: memref<8x2x32xf32, #tpu.memory_space<vmem>>, %arg6: memref<8x2x32xf32, #tpu.memory_space<vmem>>, %arg7: memref<2x32xf32, #tpu.memory_space<vmem>>, %arg8: memref<2x32xf32, #tpu.memory_space<vmem>>, %arg9: memref<2x32xf32, #tpu.memory_space<vmem>>, %arg10: memref<2x32xf32, #tpu.memory_space<vmem>>) attributes {dimension_semantics = [#tpu.dimension_semantics<arbitrary>], iteration_bounds = array<i64: 1>, scalar_prefetch = 0 : i64, scratch_operands = 4 : i64, tpu.core_type = #tpu.core_type<tc>, window_params = [{transform_indices = @transform_0, window_bounds = array<i64: 8, 2, 128>}, {transform_indices = @transform_1, window_bounds = array<i64: 8, 2, 128>}, {pipeline_mode = #tpu.pipeline_mode<synchronous>, transform_indices = @transform_2, window_bounds = array<i64: 32, 128>}, {pipeline_mode = #tpu.pipeline_mode<synchronous>, transform_indices = @transform_3, window_bounds = array<i64: 32, 128>}, {transform_indices = @transform_4, window_bounds = array<i64: 8, 2, 32>}, {transform_indices = @transform_5, window_bounds = array<i64: 8, 2, 32>}]} {
    %c0_i32 = arith.constant 0 : i32
    %0 = arith.cmpi eq, %arg0, %c0_i32 : i32
    %1 = arith.extui %0 : i1 to i32
    %c0_i32_0 = arith.constant 0 : i32
    %2 = arith.cmpi ne, %1, %c0_i32_0 : i32
    scf.if %2 {
      %cst_164 = arith.constant 0.000000e+00 : f32
      %589 = vector.broadcast %cst_164 : f32 to vector<2x32xf32>
      %c0_165 = arith.constant 0 : index
      %c0_166 = arith.constant 0 : index
      %590 = vector.load %arg7[%c0_165, %c0_166] : memref<2x32xf32, #tpu.memory_space<vmem>>, vector<2x32xf32>
      tpu.vector_store %arg7[%c0_165, %c0_166], %589 {strides = array<i32>} : memref<2x32xf32, #tpu.memory_space<vmem>>, vector<2x32xf32>,
      %cst_167 = arith.constant 0.000000e+00 : f32
      %591 = vector.broadcast %cst_167 : f32 to vector<2x32xf32>
      %c0_168 = arith.constant 0 : index
      %c0_169 = arith.constant 0 : index
      %592 = vector.load %arg8[%c0_168, %c0_169] : memref<2x32xf32, #tpu.memory_space<vmem>>, vector<2x32xf32>
      tpu.vector_store %arg8[%c0_168, %c0_169], %591 {strides = array<i32>} : memref<2x32xf32, #tpu.memory_space<vmem>>, vector<2x32xf32>,
      %cst_170 = arith.constant 0.000000e+00 : f32
      %593 = vector.broadcast %cst_170 : f32 to vector<2x32xf32>
      %c0_171 = arith.constant 0 : index
      %c0_172 = arith.constant 0 : index
      %594 = vector.load %arg9[%c0_171, %c0_172] : memref<2x32xf32, #tpu.memory_space<vmem>>, vector<2x32xf32>
      tpu.vector_store %arg9[%c0_171, %c0_172], %593 {strides = array<i32>} : memref<2x32xf32, #tpu.memory_space<vmem>>, vector<2x32xf32>,
      %cst_173 = arith.constant 0.000000e+00 : f32
      %595 = vector.broadcast %cst_173 : f32 to vector<2x32xf32>
      %c0_174 = arith.constant 0 : index
      %c0_175 = arith.constant 0 : index
      %596 = vector.load %arg10[%c0_174, %c0_175] : memref<2x32xf32, #tpu.memory_space<vmem>>, vector<2x32xf32>
      tpu.vector_store %arg10[%c0_174, %c0_175], %595 {strides = array<i32>} : memref<2x32xf32, #tpu.memory_space<vmem>>, vector<2x32xf32>,
    } else {
    }
    %c0 = arith.constant 0 : index
    %c0_1 = arith.constant 0 : index
    %3 = vector.load %arg3[%c0, %c0_1] : memref<32x128xbf16, #tpu.memory_space<vmem>>, vector<32x128xbf16>
    %c0_2 = arith.constant 0 : index
    %c0_3 = arith.constant 0 : index
    %4 = vector.load %arg4[%c0_2, %c0_3] : memref<32x128xbf16, #tpu.memory_space<vmem>>, vector<32x128xbf16>
    %c0_4 = arith.constant 0 : index
    %c0_5 = arith.constant 0 : index
    %5 = vector.load %arg7[%c0_4, %c0_5] : memref<2x32xf32, #tpu.memory_space<vmem>>, vector<2x32xf32>
    %c0_6 = arith.constant 0 : index
    %c0_7 = arith.constant 0 : index
    %6 = vector.load %arg8[%c0_6, %c0_7] : memref<2x32xf32, #tpu.memory_space<vmem>>, vector<2x32xf32>
    %c0_8 = arith.constant 0 : index
    %c0_9 = arith.constant 0 : index
    %7 = vector.load %arg9[%c0_8, %c0_9] : memref<2x32xf32, #tpu.memory_space<vmem>>, vector<2x32xf32>
    %c0_10 = arith.constant 0 : index
    %c0_11 = arith.constant 0 : index
    %8 = vector.load %arg10[%c0_10, %c0_11] : memref<2x32xf32, #tpu.memory_space<vmem>>, vector<2x32xf32>
    %c0_i32_12 = arith.constant 0 : i32
    %9 = arith.index_cast %c0_i32_12 : i32 to index
    %c0_13 = arith.constant 0 : index
    %c0_14 = arith.constant 0 : index
    %10 = vector.load %arg1[%9, %c0_13, %c0_14] : memref<8x2x128xf32, #tpu.memory_space<vmem>>, vector<1x2x128xf32>
    %11 = vector.shape_cast %10 : vector<1x2x128xf32> to vector<2x128xf32>
    %12 = arith.truncf %5 : vector<2x32xf32> to vector<2x32xbf16>
    %cst = arith.constant dense<0.000000e+00> : vector<2x128xf32>
    %13 = tpu.matmul %12, %3, %cst {dimension_numbers = #tpu.dot_dimension_numbers<[1], [0], [0], [1], [0, 0, 1, 1], [], []>} : vector<2x32xbf16>, vector<32x128xbf16>, vector<2x128xf32> -> vector<2x128xf32>
    %14 = arith.addf %11, %13 : vector<2x128xf32>
    %c7_i32 = arith.constant 7 : i32
    %15 = arith.subi %c7_i32, %c0_i32_12 : i32
    %16 = arith.index_cast %15 : i32 to index
    %c0_15 = arith.constant 0 : index
    %c0_16 = arith.constant 0 : index
    %17 = vector.load %arg2[%16, %c0_15, %c0_16] : memref<8x2x128xf32, #tpu.memory_space<vmem>>, vector<1x2x128xf32>
    %18 = vector.shape_cast %17 : vector<1x2x128xf32> to vector<2x128xf32>
    %19 = arith.truncf %7 : vector<2x32xf32> to vector<2x32xbf16>
    %cst_17 = arith.constant dense<0.000000e+00> : vector<2x128xf32>
    %20 = tpu.matmul %19, %4, %cst_17 {dimension_numbers = #tpu.dot_dimension_numbers<[1], [0], [0], [1], [0, 0, 1, 1], [], []>} : vector<2x32xbf16>, vector<32x128xbf16>, vector<2x128xf32> -> vector<2x128xf32>
    %21 = arith.addf %18, %20 : vector<2x128xf32>
    %22 = vector.extract_strided_slice %14 {offsets = [0, 0], sizes = [2, 32], strides = [1, 1]} : vector<2x128xf32> to vector<2x32xf32>
    %23 = arith.negf %22 : vector<2x32xf32>
    %24 = math.exp %23 : vector<2x32xf32>
    %cst_18 = arith.constant 1.000000e+00 : f32
    %25 = vector.broadcast %cst_18 : f32 to vector<2x32xf32>
    %26 = arith.addf %25, %24 : vector<2x32xf32>
    %27 = arith.divf %25, %26 : vector<2x32xf32>
    %28 = vector.extract_strided_slice %14 {offsets = [0, 32], sizes = [2, 32], strides = [1, 1]} : vector<2x128xf32> to vector<2x32xf32>
    %29 = arith.negf %28 : vector<2x32xf32>
    %30 = math.exp %29 : vector<2x32xf32>
    %cst_19 = arith.constant 1.000000e+00 : f32
    %31 = vector.broadcast %cst_19 : f32 to vector<2x32xf32>
    %32 = arith.addf %31, %30 : vector<2x32xf32>
    %33 = arith.divf %31, %32 : vector<2x32xf32>
    %34 = vector.extract_strided_slice %14 {offsets = [0, 64], sizes = [2, 32], strides = [1, 1]} : vector<2x128xf32> to vector<2x32xf32>
    %35 = math.tanh %34 : vector<2x32xf32>
    %36 = vector.extract_strided_slice %14 {offsets = [0, 96], sizes = [2, 32], strides = [1, 1]} : vector<2x128xf32> to vector<2x32xf32>
    %37 = arith.negf %36 : vector<2x32xf32>
    %38 = math.exp %37 : vector<2x32xf32>
    %cst_20 = arith.constant 1.000000e+00 : f32
    %39 = vector.broadcast %cst_20 : f32 to vector<2x32xf32>
    %40 = arith.addf %39, %38 : vector<2x32xf32>
    %41 = arith.divf %39, %40 : vector<2x32xf32>
    %42 = arith.mulf %33, %6 : vector<2x32xf32>
    %43 = arith.mulf %27, %35 : vector<2x32xf32>
    %44 = arith.addf %42, %43 : vector<2x32xf32>
    %45 = math.tanh %44 : vector<2x32xf32>
    %46 = arith.mulf %41, %45 : vector<2x32xf32>
    %47 = vector.extract_strided_slice %21 {offsets = [0, 0], sizes = [2, 32], strides = [1, 1]} : vector<2x128xf32> to vector<2x32xf32>
    %48 = arith.negf %47 : vector<2x32xf32>
    %49 = math.exp %48 : vector<2x32xf32>
    %cst_21 = arith.constant 1.000000e+00 : f32
    %50 = vector.broadcast %cst_21 : f32 to vector<2x32xf32>
    %51 = arith.addf %50, %49 : vector<2x32xf32>
    %52 = arith.divf %50, %51 : vector<2x32xf32>
    %53 = vector.extract_strided_slice %21 {offsets = [0, 32], sizes = [2, 32], strides = [1, 1]} : vector<2x128xf32> to vector<2x32xf32>
    %54 = arith.negf %53 : vector<2x32xf32>
    %55 = math.exp %54 : vector<2x32xf32>
    %cst_22 = arith.constant 1.000000e+00 : f32
    %56 = vector.broadcast %cst_22 : f32 to vector<2x32xf32>
    %57 = arith.addf %56, %55 : vector<2x32xf32>
    %58 = arith.divf %56, %57 : vector<2x32xf32>
    %59 = vector.extract_strided_slice %21 {offsets = [0, 64], sizes = [2, 32], strides = [1, 1]} : vector<2x128xf32> to vector<2x32xf32>
    %60 = math.tanh %59 : vector<2x32xf32>
    %61 = vector.extract_strided_slice %21 {offsets = [0, 96], sizes = [2, 32], strides = [1, 1]} : vector<2x128xf32> to vector<2x32xf32>
    %62 = arith.negf %61 : vector<2x32xf32>
    %63 = math.exp %62 : vector<2x32xf32>
    %cst_23 = arith.constant 1.000000e+00 : f32
    %64 = vector.broadcast %cst_23 : f32 to vector<2x32xf32>
    %65 = arith.addf %64, %63 : vector<2x32xf32>
    %66 = arith.divf %64, %65 : vector<2x32xf32>
    %67 = arith.mulf %58, %8 : vector<2x32xf32>
    %68 = arith.mulf %52, %60 : vector<2x32xf32>
    %69 = arith.addf %67, %68 : vector<2x32xf32>
    %70 = math.tanh %69 : vector<2x32xf32>
    %71 = arith.mulf %66, %70 : vector<2x32xf32>
    %72 = arith.index_cast %c0_i32_12 : i32 to index
    %c0_24 = arith.constant 0 : index
    %c0_25 = arith.constant 0 : index
    %73 = vector.load %arg5[%72, %c0_24, %c0_25] : memref<8x2x32xf32, #tpu.memory_space<vmem>>, vector<1x2x32xf32>
    %74 = vector.shape_cast %73 : vector<1x2x32xf32> to vector<2x32xf32>
    %75 = vector.shape_cast %46 : vector<2x32xf32> to vector<1x2x32xf32>
    tpu.vector_store %arg5[%72, %c0_24, %c0_25], %75 {strides = array<i32>} : memref<8x2x32xf32, #tpu.memory_space<vmem>>, vector<1x2x32xf32>,
    %c7_i32_26 = arith.constant 7 : i32
    %76 = arith.subi %c7_i32_26, %c0_i32_12 : i32
    %77 = arith.index_cast %76 : i32 to index
    %c0_27 = arith.constant 0 : index
    %c0_28 = arith.constant 0 : index
    %78 = vector.load %arg6[%77, %c0_27, %c0_28] : memref<8x2x32xf32, #tpu.memory_space<vmem>>, vector<1x2x32xf32>
    %79 = vector.shape_cast %78 : vector<1x2x32xf32> to vector<2x32xf32>
    %80 = vector.shape_cast %71 : vector<2x32xf32> to vector<1x2x32xf32>
    tpu.vector_store %arg6[%77, %c0_27, %c0_28], %80 {strides = array<i32>} : memref<8x2x32xf32, #tpu.memory_space<vmem>>, vector<1x2x32xf32>,
    %c1_i32 = arith.constant 1 : i32
    %81 = arith.index_cast %c1_i32 : i32 to index
    %c0_29 = arith.constant 0 : index
    %c0_30 = arith.constant 0 : index
    %82 = vector.load %arg1[%81, %c0_29, %c0_30] : memref<8x2x128xf32, #tpu.memory_space<vmem>>, vector<1x2x128xf32>
    %83 = vector.shape_cast %82 : vector<1x2x128xf32> to vector<2x128xf32>
    %84 = arith.truncf %46 : vector<2x32xf32> to vector<2x32xbf16>
    %cst_31 = arith.constant dense<0.000000e+00> : vector<2x128xf32>
    %85 = tpu.matmul %84, %3, %cst_31 {dimension_numbers = #tpu.dot_dimension_numbers<[1], [0], [0], [1], [0, 0, 1, 1], [], []>} : vector<2x32xbf16>, vector<32x128xbf16>, vector<2x128xf32> -> vector<2x128xf32>
    %86 = arith.addf %83, %85 : vector<2x128xf32>
    %c7_i32_32 = arith.constant 7 : i32
    %87 = arith.subi %c7_i32_32, %c1_i32 : i32
    %88 = arith.index_cast %87 : i32 to index
    %c0_33 = arith.constant 0 : index
    %c0_34 = arith.constant 0 : index
    %89 = vector.load %arg2[%88, %c0_33, %c0_34] : memref<8x2x128xf32, #tpu.memory_space<vmem>>, vector<1x2x128xf32>
    %90 = vector.shape_cast %89 : vector<1x2x128xf32> to vector<2x128xf32>
    %91 = arith.truncf %71 : vector<2x32xf32> to vector<2x32xbf16>
    %cst_35 = arith.constant dense<0.000000e+00> : vector<2x128xf32>
    %92 = tpu.matmul %91, %4, %cst_35 {dimension_numbers = #tpu.dot_dimension_numbers<[1], [0], [0], [1], [0, 0, 1, 1], [], []>} : vector<2x32xbf16>, vector<32x128xbf16>, vector<2x128xf32> -> vector<2x128xf32>
    %93 = arith.addf %90, %92 : vector<2x128xf32>
    %94 = vector.extract_strided_slice %86 {offsets = [0, 0], sizes = [2, 32], strides = [1, 1]} : vector<2x128xf32> to vector<2x32xf32>
    %95 = arith.negf %94 : vector<2x32xf32>
    %96 = math.exp %95 : vector<2x32xf32>
    %cst_36 = arith.constant 1.000000e+00 : f32
    %97 = vector.broadcast %cst_36 : f32 to vector<2x32xf32>
    %98 = arith.addf %97, %96 : vector<2x32xf32>
    %99 = arith.divf %97, %98 : vector<2x32xf32>
    %100 = vector.extract_strided_slice %86 {offsets = [0, 32], sizes = [2, 32], strides = [1, 1]} : vector<2x128xf32> to vector<2x32xf32>
    %101 = arith.negf %100 : vector<2x32xf32>
    %102 = math.exp %101 : vector<2x32xf32>
    %cst_37 = arith.constant 1.000000e+00 : f32
    %103 = vector.broadcast %cst_37 : f32 to vector<2x32xf32>
    %104 = arith.addf %103, %102 : vector<2x32xf32>
    %105 = arith.divf %103, %104 : vector<2x32xf32>
    %106 = vector.extract_strided_slice %86 {offsets = [0, 64], sizes = [2, 32], strides = [1, 1]} : vector<2x128xf32> to vector<2x32xf32>
    %107 = math.tanh %106 : vector<2x32xf32>
    %108 = vector.extract_strided_slice %86 {offsets = [0, 96], sizes = [2, 32], strides = [1, 1]} : vector<2x128xf32> to vector<2x32xf32>
    %109 = arith.negf %108 : vector<2x32xf32>
    %110 = math.exp %109 : vector<2x32xf32>
    %cst_38 = arith.constant 1.000000e+00 : f32
    %111 = vector.broadcast %cst_38 : f32 to vector<2x32xf32>
    %112 = arith.addf %111, %110 : vector<2x32xf32>
    %113 = arith.divf %111, %112 : vector<2x32xf32>
    %114 = arith.mulf %105, %44 : vector<2x32xf32>
    %115 = arith.mulf %99, %107 : vector<2x32xf32>
    %116 = arith.addf %114, %115 : vector<2x32xf32>
    %117 = math.tanh %116 : vector<2x32xf32>
    %118 = arith.mulf %113, %117 : vector<2x32xf32>
    %119 = vector.extract_strided_slice %93 {offsets = [0, 0], sizes = [2, 32], strides = [1, 1]} : vector<2x128xf32> to vector<2x32xf32>
    %120 = arith.negf %119 : vector<2x32xf32>
    %121 = math.exp %120 : vector<2x32xf32>
    %cst_39 = arith.constant 1.000000e+00 : f32
    %122 = vector.broadcast %cst_39 : f32 to vector<2x32xf32>
    %123 = arith.addf %122, %121 : vector<2x32xf32>
    %124 = arith.divf %122, %123 : vector<2x32xf32>
    %125 = vector.extract_strided_slice %93 {offsets = [0, 32], sizes = [2, 32], strides = [1, 1]} : vector<2x128xf32> to vector<2x32xf32>
    %126 = arith.negf %125 : vector<2x32xf32>
    %127 = math.exp %126 : vector<2x32xf32>
    %cst_40 = arith.constant 1.000000e+00 : f32
    %128 = vector.broadcast %cst_40 : f32 to vector<2x32xf32>
    %129 = arith.addf %128, %127 : vector<2x32xf32>
    %130 = arith.divf %128, %129 : vector<2x32xf32>
    %131 = vector.extract_strided_slice %93 {offsets = [0, 64], sizes = [2, 32], strides = [1, 1]} : vector<2x128xf32> to vector<2x32xf32>
    %132 = math.tanh %131 : vector<2x32xf32>
    %133 = vector.extract_strided_slice %93 {offsets = [0, 96], sizes = [2, 32], strides = [1, 1]} : vector<2x128xf32> to vector<2x32xf32>
    %134 = arith.negf %133 : vector<2x32xf32>
    %135 = math.exp %134 : vector<2x32xf32>
    %cst_41 = arith.constant 1.000000e+00 : f32
    %136 = vector.broadcast %cst_41 : f32 to vector<2x32xf32>
    %137 = arith.addf %136, %135 : vector<2x32xf32>
    %138 = arith.divf %136, %137 : vector<2x32xf32>
    %139 = arith.mulf %130, %69 : vector<2x32xf32>
    %140 = arith.mulf %124, %132 : vector<2x32xf32>
    %141 = arith.addf %139, %140 : vector<2x32xf32>
    %142 = math.tanh %141 : vector<2x32xf32>
    %143 = arith.mulf %138, %142 : vector<2x32xf32>
    %144 = arith.index_cast %c1_i32 : i32 to index
    %c0_42 = arith.constant 0 : index
    %c0_43 = arith.constant 0 : index
    %145 = vector.load %arg5[%144, %c0_42, %c0_43] : memref<8x2x32xf32, #tpu.memory_space<vmem>>, vector<1x2x32xf32>
    %146 = vector.shape_cast %145 : vector<1x2x32xf32> to vector<2x32xf32>
    %147 = vector.shape_cast %118 : vector<2x32xf32> to vector<1x2x32xf32>
    tpu.vector_store %arg5[%144, %c0_42, %c0_43], %147 {strides = array<i32>} : memref<8x2x32xf32, #tpu.memory_space<vmem>>, vector<1x2x32xf32>,
    %c7_i32_44 = arith.constant 7 : i32
    %148 = arith.subi %c7_i32_44, %c1_i32 : i32
    %149 = arith.index_cast %148 : i32 to index
    %c0_45 = arith.constant 0 : index
    %c0_46 = arith.constant 0 : index
    %150 = vector.load %arg6[%149, %c0_45, %c0_46] : memref<8x2x32xf32, #tpu.memory_space<vmem>>, vector<1x2x32xf32>
    %151 = vector.shape_cast %150 : vector<1x2x32xf32> to vector<2x32xf32>
    %152 = vector.shape_cast %143 : vector<2x32xf32> to vector<1x2x32xf32>
    tpu.vector_store %arg6[%149, %c0_45, %c0_46], %152 {strides = array<i32>} : memref<8x2x32xf32, #tpu.memory_space<vmem>>, vector<1x2x32xf32>,
    %c2_i32 = arith.constant 2 : i32
    %153 = arith.index_cast %c2_i32 : i32 to index
    %c0_47 = arith.constant 0 : index
    %c0_48 = arith.constant 0 : index
    %154 = vector.load %arg1[%153, %c0_47, %c0_48] : memref<8x2x128xf32, #tpu.memory_space<vmem>>, vector<1x2x128xf32>
    %155 = vector.shape_cast %154 : vector<1x2x128xf32> to vector<2x128xf32>
    %156 = arith.truncf %118 : vector<2x32xf32> to vector<2x32xbf16>
    %cst_49 = arith.constant dense<0.000000e+00> : vector<2x128xf32>
    %157 = tpu.matmul %156, %3, %cst_49 {dimension_numbers = #tpu.dot_dimension_numbers<[1], [0], [0], [1], [0, 0, 1, 1], [], []>} : vector<2x32xbf16>, vector<32x128xbf16>, vector<2x128xf32> -> vector<2x128xf32>
    %158 = arith.addf %155, %157 : vector<2x128xf32>
    %c7_i32_50 = arith.constant 7 : i32
    %159 = arith.subi %c7_i32_50, %c2_i32 : i32
    %160 = arith.index_cast %159 : i32 to index
    %c0_51 = arith.constant 0 : index
    %c0_52 = arith.constant 0 : index
    %161 = vector.load %arg2[%160, %c0_51, %c0_52] : memref<8x2x128xf32, #tpu.memory_space<vmem>>, vector<1x2x128xf32>
    %162 = vector.shape_cast %161 : vector<1x2x128xf32> to vector<2x128xf32>
    %163 = arith.truncf %143 : vector<2x32xf32> to vector<2x32xbf16>
    %cst_53 = arith.constant dense<0.000000e+00> : vector<2x128xf32>
    %164 = tpu.matmul %163, %4, %cst_53 {dimension_numbers = #tpu.dot_dimension_numbers<[1], [0], [0], [1], [0, 0, 1, 1], [], []>} : vector<2x32xbf16>, vector<32x128xbf16>, vector<2x128xf32> -> vector<2x128xf32>
    %165 = arith.addf %162, %164 : vector<2x128xf32>
    %166 = vector.extract_strided_slice %158 {offsets = [0, 0], sizes = [2, 32], strides = [1, 1]} : vector<2x128xf32> to vector<2x32xf32>
    %167 = arith.negf %166 : vector<2x32xf32>
    %168 = math.exp %167 : vector<2x32xf32>
    %cst_54 = arith.constant 1.000000e+00 : f32
    %169 = vector.broadcast %cst_54 : f32 to vector<2x32xf32>
    %170 = arith.addf %169, %168 : vector<2x32xf32>
    %171 = arith.divf %169, %170 : vector<2x32xf32>
    %172 = vector.extract_strided_slice %158 {offsets = [0, 32], sizes = [2, 32], strides = [1, 1]} : vector<2x128xf32> to vector<2x32xf32>
    %173 = arith.negf %172 : vector<2x32xf32>
    %174 = math.exp %173 : vector<2x32xf32>
    %cst_55 = arith.constant 1.000000e+00 : f32
    %175 = vector.broadcast %cst_55 : f32 to vector<2x32xf32>
    %176 = arith.addf %175, %174 : vector<2x32xf32>
    %177 = arith.divf %175, %176 : vector<2x32xf32>
    %178 = vector.extract_strided_slice %158 {offsets = [0, 64], sizes = [2, 32], strides = [1, 1]} : vector<2x128xf32> to vector<2x32xf32>
    %179 = math.tanh %178 : vector<2x32xf32>
    %180 = vector.extract_strided_slice %158 {offsets = [0, 96], sizes = [2, 32], strides = [1, 1]} : vector<2x128xf32> to vector<2x32xf32>
    %181 = arith.negf %180 : vector<2x32xf32>
    %182 = math.exp %181 : vector<2x32xf32>
    %cst_56 = arith.constant 1.000000e+00 : f32
    %183 = vector.broadcast %cst_56 : f32 to vector<2x32xf32>
    %184 = arith.addf %183, %182 : vector<2x32xf32>
    %185 = arith.divf %183, %184 : vector<2x32xf32>
    %186 = arith.mulf %177, %116 : vector<2x32xf32>
    %187 = arith.mulf %171, %179 : vector<2x32xf32>
    %188 = arith.addf %186, %187 : vector<2x32xf32>
    %189 = math.tanh %188 : vector<2x32xf32>
    %190 = arith.mulf %185, %189 : vector<2x32xf32>
    %191 = vector.extract_strided_slice %165 {offsets = [0, 0], sizes = [2, 32], strides = [1, 1]} : vector<2x128xf32> to vector<2x32xf32>
    %192 = arith.negf %191 : vector<2x32xf32>
    %193 = math.exp %192 : vector<2x32xf32>
    %cst_57 = arith.constant 1.000000e+00 : f32
    %194 = vector.broadcast %cst_57 : f32 to vector<2x32xf32>
    %195 = arith.addf %194, %193 : vector<2x32xf32>
    %196 = arith.divf %194, %195 : vector<2x32xf32>
    %197 = vector.extract_strided_slice %165 {offsets = [0, 32], sizes = [2, 32], strides = [1, 1]} : vector<2x128xf32> to vector<2x32xf32>
    %198 = arith.negf %197 : vector<2x32xf32>
    %199 = math.exp %198 : vector<2x32xf32>
    %cst_58 = arith.constant 1.000000e+00 : f32
    %200 = vector.broadcast %cst_58 : f32 to vector<2x32xf32>
    %201 = arith.addf %200, %199 : vector<2x32xf32>
    %202 = arith.divf %200, %201 : vector<2x32xf32>
    %203 = vector.extract_strided_slice %165 {offsets = [0, 64], sizes = [2, 32], strides = [1, 1]} : vector<2x128xf32> to vector<2x32xf32>
    %204 = math.tanh %203 : vector<2x32xf32>
    %205 = vector.extract_strided_slice %165 {offsets = [0, 96], sizes = [2, 32], strides = [1, 1]} : vector<2x128xf32> to vector<2x32xf32>
    %206 = arith.negf %205 : vector<2x32xf32>
    %207 = math.exp %206 : vector<2x32xf32>
    %cst_59 = arith.constant 1.000000e+00 : f32
    %208 = vector.broadcast %cst_59 : f32 to vector<2x32xf32>
    %209 = arith.addf %208, %207 : vector<2x32xf32>
    %210 = arith.divf %208, %209 : vector<2x32xf32>
    %211 = arith.mulf %202, %141 : vector<2x32xf32>
    %212 = arith.mulf %196, %204 : vector<2x32xf32>
    %213 = arith.addf %211, %212 : vector<2x32xf32>
    %214 = math.tanh %213 : vector<2x32xf32>
    %215 = arith.mulf %210, %214 : vector<2x32xf32>
    %216 = arith.index_cast %c2_i32 : i32 to index
    %c0_60 = arith.constant 0 : index
    %c0_61 = arith.constant 0 : index
    %217 = vector.load %arg5[%216, %c0_60, %c0_61] : memref<8x2x32xf32, #tpu.memory_space<vmem>>, vector<1x2x32xf32>
    %218 = vector.shape_cast %217 : vector<1x2x32xf32> to vector<2x32xf32>
    %219 = vector.shape_cast %190 : vector<2x32xf32> to vector<1x2x32xf32>
    tpu.vector_store %arg5[%216, %c0_60, %c0_61], %219 {strides = array<i32>} : memref<8x2x32xf32, #tpu.memory_space<vmem>>, vector<1x2x32xf32>,
    %c7_i32_62 = arith.constant 7 : i32
    %220 = arith.subi %c7_i32_62, %c2_i32 : i32
    %221 = arith.index_cast %220 : i32 to index
    %c0_63 = arith.constant 0 : index
    %c0_64 = arith.constant 0 : index
    %222 = vector.load %arg6[%221, %c0_63, %c0_64] : memref<8x2x32xf32, #tpu.memory_space<vmem>>, vector<1x2x32xf32>
    %223 = vector.shape_cast %222 : vector<1x2x32xf32> to vector<2x32xf32>
    %224 = vector.shape_cast %215 : vector<2x32xf32> to vector<1x2x32xf32>
    tpu.vector_store %arg6[%221, %c0_63, %c0_64], %224 {strides = array<i32>} : memref<8x2x32xf32, #tpu.memory_space<vmem>>, vector<1x2x32xf32>,
    %c3_i32 = arith.constant 3 : i32
    %225 = arith.index_cast %c3_i32 : i32 to index
    %c0_65 = arith.constant 0 : index
    %c0_66 = arith.constant 0 : index
    %226 = vector.load %arg1[%225, %c0_65, %c0_66] : memref<8x2x128xf32, #tpu.memory_space<vmem>>, vector<1x2x128xf32>
    %227 = vector.shape_cast %226 : vector<1x2x128xf32> to vector<2x128xf32>
    %228 = arith.truncf %190 : vector<2x32xf32> to vector<2x32xbf16>
    %cst_67 = arith.constant dense<0.000000e+00> : vector<2x128xf32>
    %229 = tpu.matmul %228, %3, %cst_67 {dimension_numbers = #tpu.dot_dimension_numbers<[1], [0], [0], [1], [0, 0, 1, 1], [], []>} : vector<2x32xbf16>, vector<32x128xbf16>, vector<2x128xf32> -> vector<2x128xf32>
    %230 = arith.addf %227, %229 : vector<2x128xf32>
    %c7_i32_68 = arith.constant 7 : i32
    %231 = arith.subi %c7_i32_68, %c3_i32 : i32
    %232 = arith.index_cast %231 : i32 to index
    %c0_69 = arith.constant 0 : index
    %c0_70 = arith.constant 0 : index
    %233 = vector.load %arg2[%232, %c0_69, %c0_70] : memref<8x2x128xf32, #tpu.memory_space<vmem>>, vector<1x2x128xf32>
    %234 = vector.shape_cast %233 : vector<1x2x128xf32> to vector<2x128xf32>
    %235 = arith.truncf %215 : vector<2x32xf32> to vector<2x32xbf16>
    %cst_71 = arith.constant dense<0.000000e+00> : vector<2x128xf32>
    %236 = tpu.matmul %235, %4, %cst_71 {dimension_numbers = #tpu.dot_dimension_numbers<[1], [0], [0], [1], [0, 0, 1, 1], [], []>} : vector<2x32xbf16>, vector<32x128xbf16>, vector<2x128xf32> -> vector<2x128xf32>
    %237 = arith.addf %234, %236 : vector<2x128xf32>
    %238 = vector.extract_strided_slice %230 {offsets = [0, 0], sizes = [2, 32], strides = [1, 1]} : vector<2x128xf32> to vector<2x32xf32>
    %239 = arith.negf %238 : vector<2x32xf32>
    %240 = math.exp %239 : vector<2x32xf32>
    %cst_72 = arith.constant 1.000000e+00 : f32
    %241 = vector.broadcast %cst_72 : f32 to vector<2x32xf32>
    %242 = arith.addf %241, %240 : vector<2x32xf32>
    %243 = arith.divf %241, %242 : vector<2x32xf32>
    %244 = vector.extract_strided_slice %230 {offsets = [0, 32], sizes = [2, 32], strides = [1, 1]} : vector<2x128xf32> to vector<2x32xf32>
    %245 = arith.negf %244 : vector<2x32xf32>
    %246 = math.exp %245 : vector<2x32xf32>
    %cst_73 = arith.constant 1.000000e+00 : f32
    %247 = vector.broadcast %cst_73 : f32 to vector<2x32xf32>
    %248 = arith.addf %247, %246 : vector<2x32xf32>
    %249 = arith.divf %247, %248 : vector<2x32xf32>
    %250 = vector.extract_strided_slice %230 {offsets = [0, 64], sizes = [2, 32], strides = [1, 1]} : vector<2x128xf32> to vector<2x32xf32>
    %251 = math.tanh %250 : vector<2x32xf32>
    %252 = vector.extract_strided_slice %230 {offsets = [0, 96], sizes = [2, 32], strides = [1, 1]} : vector<2x128xf32> to vector<2x32xf32>
    %253 = arith.negf %252 : vector<2x32xf32>
    %254 = math.exp %253 : vector<2x32xf32>
    %cst_74 = arith.constant 1.000000e+00 : f32
    %255 = vector.broadcast %cst_74 : f32 to vector<2x32xf32>
    %256 = arith.addf %255, %254 : vector<2x32xf32>
    %257 = arith.divf %255, %256 : vector<2x32xf32>
    %258 = arith.mulf %249, %188 : vector<2x32xf32>
    %259 = arith.mulf %243, %251 : vector<2x32xf32>
    %260 = arith.addf %258, %259 : vector<2x32xf32>
    %261 = math.tanh %260 : vector<2x32xf32>
    %262 = arith.mulf %257, %261 : vector<2x32xf32>
    %263 = vector.extract_strided_slice %237 {offsets = [0, 0], sizes = [2, 32], strides = [1, 1]} : vector<2x128xf32> to vector<2x32xf32>
    %264 = arith.negf %263 : vector<2x32xf32>
    %265 = math.exp %264 : vector<2x32xf32>
    %cst_75 = arith.constant 1.000000e+00 : f32
    %266 = vector.broadcast %cst_75 : f32 to vector<2x32xf32>
    %267 = arith.addf %266, %265 : vector<2x32xf32>
    %268 = arith.divf %266, %267 : vector<2x32xf32>
    %269 = vector.extract_strided_slice %237 {offsets = [0, 32], sizes = [2, 32], strides = [1, 1]} : vector<2x128xf32> to vector<2x32xf32>
    %270 = arith.negf %269 : vector<2x32xf32>
    %271 = math.exp %270 : vector<2x32xf32>
    %cst_76 = arith.constant 1.000000e+00 : f32
    %272 = vector.broadcast %cst_76 : f32 to vector<2x32xf32>
    %273 = arith.addf %272, %271 : vector<2x32xf32>
    %274 = arith.divf %272, %273 : vector<2x32xf32>
    %275 = vector.extract_strided_slice %237 {offsets = [0, 64], sizes = [2, 32], strides = [1, 1]} : vector<2x128xf32> to vector<2x32xf32>
    %276 = math.tanh %275 : vector<2x32xf32>
    %277 = vector.extract_strided_slice %237 {offsets = [0, 96], sizes = [2, 32], strides = [1, 1]} : vector<2x128xf32> to vector<2x32xf32>
    %278 = arith.negf %277 : vector<2x32xf32>
    %279 = math.exp %278 : vector<2x32xf32>
    %cst_77 = arith.constant 1.000000e+00 : f32
    %280 = vector.broadcast %cst_77 : f32 to vector<2x32xf32>
    %281 = arith.addf %280, %279 : vector<2x32xf32>
    %282 = arith.divf %280, %281 : vector<2x32xf32>
    %283 = arith.mulf %274, %213 : vector<2x32xf32>
    %284 = arith.mulf %268, %276 : vector<2x32xf32>
    %285 = arith.addf %283, %284 : vector<2x32xf32>
    %286 = math.tanh %285 : vector<2x32xf32>
    %287 = arith.mulf %282, %286 : vector<2x32xf32>
    %288 = arith.index_cast %c3_i32 : i32 to index
    %c0_78 = arith.constant 0 : index
    %c0_79 = arith.constant 0 : index
    %289 = vector.load %arg5[%288, %c0_78, %c0_79] : memref<8x2x32xf32, #tpu.memory_space<vmem>>, vector<1x2x32xf32>
    %290 = vector.shape_cast %289 : vector<1x2x32xf32> to vector<2x32xf32>
    %291 = vector.shape_cast %262 : vector<2x32xf32> to vector<1x2x32xf32>
    tpu.vector_store %arg5[%288, %c0_78, %c0_79], %291 {strides = array<i32>} : memref<8x2x32xf32, #tpu.memory_space<vmem>>, vector<1x2x32xf32>,
    %c7_i32_80 = arith.constant 7 : i32
    %292 = arith.subi %c7_i32_80, %c3_i32 : i32
    %293 = arith.index_cast %292 : i32 to index
    %c0_81 = arith.constant 0 : index
    %c0_82 = arith.constant 0 : index
    %294 = vector.load %arg6[%293, %c0_81, %c0_82] : memref<8x2x32xf32, #tpu.memory_space<vmem>>, vector<1x2x32xf32>
    %295 = vector.shape_cast %294 : vector<1x2x32xf32> to vector<2x32xf32>
    %296 = vector.shape_cast %287 : vector<2x32xf32> to vector<1x2x32xf32>
    tpu.vector_store %arg6[%293, %c0_81, %c0_82], %296 {strides = array<i32>} : memref<8x2x32xf32, #tpu.memory_space<vmem>>, vector<1x2x32xf32>,
    %c4_i32 = arith.constant 4 : i32
    %297 = arith.index_cast %c4_i32 : i32 to index
    %c0_83 = arith.constant 0 : index
    %c0_84 = arith.constant 0 : index
    %298 = vector.load %arg1[%297, %c0_83, %c0_84] : memref<8x2x128xf32, #tpu.memory_space<vmem>>, vector<1x2x128xf32>
    %299 = vector.shape_cast %298 : vector<1x2x128xf32> to vector<2x128xf32>
    %300 = arith.truncf %262 : vector<2x32xf32> to vector<2x32xbf16>
    %cst_85 = arith.constant dense<0.000000e+00> : vector<2x128xf32>
    %301 = tpu.matmul %300, %3, %cst_85 {dimension_numbers = #tpu.dot_dimension_numbers<[1], [0], [0], [1], [0, 0, 1, 1], [], []>} : vector<2x32xbf16>, vector<32x128xbf16>, vector<2x128xf32> -> vector<2x128xf32>
    %302 = arith.addf %299, %301 : vector<2x128xf32>
    %c7_i32_86 = arith.constant 7 : i32
    %303 = arith.subi %c7_i32_86, %c4_i32 : i32
    %304 = arith.index_cast %303 : i32 to index
    %c0_87 = arith.constant 0 : index
    %c0_88 = arith.constant 0 : index
    %305 = vector.load %arg2[%304, %c0_87, %c0_88] : memref<8x2x128xf32, #tpu.memory_space<vmem>>, vector<1x2x128xf32>
    %306 = vector.shape_cast %305 : vector<1x2x128xf32> to vector<2x128xf32>
    %307 = arith.truncf %287 : vector<2x32xf32> to vector<2x32xbf16>
    %cst_89 = arith.constant dense<0.000000e+00> : vector<2x128xf32>
    %308 = tpu.matmul %307, %4, %cst_89 {dimension_numbers = #tpu.dot_dimension_numbers<[1], [0], [0], [1], [0, 0, 1, 1], [], []>} : vector<2x32xbf16>, vector<32x128xbf16>, vector<2x128xf32> -> vector<2x128xf32>
    %309 = arith.addf %306, %308 : vector<2x128xf32>
    %310 = vector.extract_strided_slice %302 {offsets = [0, 0], sizes = [2, 32], strides = [1, 1]} : vector<2x128xf32> to vector<2x32xf32>
    %311 = arith.negf %310 : vector<2x32xf32>
    %312 = math.exp %311 : vector<2x32xf32>
    %cst_90 = arith.constant 1.000000e+00 : f32
    %313 = vector.broadcast %cst_90 : f32 to vector<2x32xf32>
    %314 = arith.addf %313, %312 : vector<2x32xf32>
    %315 = arith.divf %313, %314 : vector<2x32xf32>
    %316 = vector.extract_strided_slice %302 {offsets = [0, 32], sizes = [2, 32], strides = [1, 1]} : vector<2x128xf32> to vector<2x32xf32>
    %317 = arith.negf %316 : vector<2x32xf32>
    %318 = math.exp %317 : vector<2x32xf32>
    %cst_91 = arith.constant 1.000000e+00 : f32
    %319 = vector.broadcast %cst_91 : f32 to vector<2x32xf32>
    %320 = arith.addf %319, %318 : vector<2x32xf32>
    %321 = arith.divf %319, %320 : vector<2x32xf32>
    %322 = vector.extract_strided_slice %302 {offsets = [0, 64], sizes = [2, 32], strides = [1, 1]} : vector<2x128xf32> to vector<2x32xf32>
    %323 = math.tanh %322 : vector<2x32xf32>
    %324 = vector.extract_strided_slice %302 {offsets = [0, 96], sizes = [2, 32], strides = [1, 1]} : vector<2x128xf32> to vector<2x32xf32>
    %325 = arith.negf %324 : vector<2x32xf32>
    %326 = math.exp %325 : vector<2x32xf32>
    %cst_92 = arith.constant 1.000000e+00 : f32
    %327 = vector.broadcast %cst_92 : f32 to vector<2x32xf32>
    %328 = arith.addf %327, %326 : vector<2x32xf32>
    %329 = arith.divf %327, %328 : vector<2x32xf32>
    %330 = arith.mulf %321, %260 : vector<2x32xf32>
    %331 = arith.mulf %315, %323 : vector<2x32xf32>
    %332 = arith.addf %330, %331 : vector<2x32xf32>
    %333 = math.tanh %332 : vector<2x32xf32>
    %334 = arith.mulf %329, %333 : vector<2x32xf32>
    %335 = vector.extract_strided_slice %309 {offsets = [0, 0], sizes = [2, 32], strides = [1, 1]} : vector<2x128xf32> to vector<2x32xf32>
    %336 = arith.negf %335 : vector<2x32xf32>
    %337 = math.exp %336 : vector<2x32xf32>
    %cst_93 = arith.constant 1.000000e+00 : f32
    %338 = vector.broadcast %cst_93 : f32 to vector<2x32xf32>
    %339 = arith.addf %338, %337 : vector<2x32xf32>
    %340 = arith.divf %338, %339 : vector<2x32xf32>
    %341 = vector.extract_strided_slice %309 {offsets = [0, 32], sizes = [2, 32], strides = [1, 1]} : vector<2x128xf32> to vector<2x32xf32>
    %342 = arith.negf %341 : vector<2x32xf32>
    %343 = math.exp %342 : vector<2x32xf32>
    %cst_94 = arith.constant 1.000000e+00 : f32
    %344 = vector.broadcast %cst_94 : f32 to vector<2x32xf32>
    %345 = arith.addf %344, %343 : vector<2x32xf32>
    %346 = arith.divf %344, %345 : vector<2x32xf32>
    %347 = vector.extract_strided_slice %309 {offsets = [0, 64], sizes = [2, 32], strides = [1, 1]} : vector<2x128xf32> to vector<2x32xf32>
    %348 = math.tanh %347 : vector<2x32xf32>
    %349 = vector.extract_strided_slice %309 {offsets = [0, 96], sizes = [2, 32], strides = [1, 1]} : vector<2x128xf32> to vector<2x32xf32>
    %350 = arith.negf %349 : vector<2x32xf32>
    %351 = math.exp %350 : vector<2x32xf32>
    %cst_95 = arith.constant 1.000000e+00 : f32
    %352 = vector.broadcast %cst_95 : f32 to vector<2x32xf32>
    %353 = arith.addf %352, %351 : vector<2x32xf32>
    %354 = arith.divf %352, %353 : vector<2x32xf32>
    %355 = arith.mulf %346, %285 : vector<2x32xf32>
    %356 = arith.mulf %340, %348 : vector<2x32xf32>
    %357 = arith.addf %355, %356 : vector<2x32xf32>
    %358 = math.tanh %357 : vector<2x32xf32>
    %359 = arith.mulf %354, %358 : vector<2x32xf32>
    %360 = arith.index_cast %c4_i32 : i32 to index
    %c0_96 = arith.constant 0 : index
    %c0_97 = arith.constant 0 : index
    %361 = vector.load %arg5[%360, %c0_96, %c0_97] : memref<8x2x32xf32, #tpu.memory_space<vmem>>, vector<1x2x32xf32>
    %362 = vector.shape_cast %361 : vector<1x2x32xf32> to vector<2x32xf32>
    %363 = vector.shape_cast %334 : vector<2x32xf32> to vector<1x2x32xf32>
    tpu.vector_store %arg5[%360, %c0_96, %c0_97], %363 {strides = array<i32>} : memref<8x2x32xf32, #tpu.memory_space<vmem>>, vector<1x2x32xf32>,
    %c7_i32_98 = arith.constant 7 : i32
    %364 = arith.subi %c7_i32_98, %c4_i32 : i32
    %365 = arith.index_cast %364 : i32 to index
    %c0_99 = arith.constant 0 : index
    %c0_100 = arith.constant 0 : index
    %366 = vector.load %arg6[%365, %c0_99, %c0_100] : memref<8x2x32xf32, #tpu.memory_space<vmem>>, vector<1x2x32xf32>
    %367 = vector.shape_cast %366 : vector<1x2x32xf32> to vector<2x32xf32>
    %368 = vector.shape_cast %359 : vector<2x32xf32> to vector<1x2x32xf32>
    tpu.vector_store %arg6[%365, %c0_99, %c0_100], %368 {strides = array<i32>} : memref<8x2x32xf32, #tpu.memory_space<vmem>>, vector<1x2x32xf32>,
    %c5_i32 = arith.constant 5 : i32
    %369 = arith.index_cast %c5_i32 : i32 to index
    %c0_101 = arith.constant 0 : index
    %c0_102 = arith.constant 0 : index
    %370 = vector.load %arg1[%369, %c0_101, %c0_102] : memref<8x2x128xf32, #tpu.memory_space<vmem>>, vector<1x2x128xf32>
    %371 = vector.shape_cast %370 : vector<1x2x128xf32> to vector<2x128xf32>
    %372 = arith.truncf %334 : vector<2x32xf32> to vector<2x32xbf16>
    %cst_103 = arith.constant dense<0.000000e+00> : vector<2x128xf32>
    %373 = tpu.matmul %372, %3, %cst_103 {dimension_numbers = #tpu.dot_dimension_numbers<[1], [0], [0], [1], [0, 0, 1, 1], [], []>} : vector<2x32xbf16>, vector<32x128xbf16>, vector<2x128xf32> -> vector<2x128xf32>
    %374 = arith.addf %371, %373 : vector<2x128xf32>
    %c7_i32_104 = arith.constant 7 : i32
    %375 = arith.subi %c7_i32_104, %c5_i32 : i32
    %376 = arith.index_cast %375 : i32 to index
    %c0_105 = arith.constant 0 : index
    %c0_106 = arith.constant 0 : index
    %377 = vector.load %arg2[%376, %c0_105, %c0_106] : memref<8x2x128xf32, #tpu.memory_space<vmem>>, vector<1x2x128xf32>
    %378 = vector.shape_cast %377 : vector<1x2x128xf32> to vector<2x128xf32>
    %379 = arith.truncf %359 : vector<2x32xf32> to vector<2x32xbf16>
    %cst_107 = arith.constant dense<0.000000e+00> : vector<2x128xf32>
    %380 = tpu.matmul %379, %4, %cst_107 {dimension_numbers = #tpu.dot_dimension_numbers<[1], [0], [0], [1], [0, 0, 1, 1], [], []>} : vector<2x32xbf16>, vector<32x128xbf16>, vector<2x128xf32> -> vector<2x128xf32>
    %381 = arith.addf %378, %380 : vector<2x128xf32>
    %382 = vector.extract_strided_slice %374 {offsets = [0, 0], sizes = [2, 32], strides = [1, 1]} : vector<2x128xf32> to vector<2x32xf32>
    %383 = arith.negf %382 : vector<2x32xf32>
    %384 = math.exp %383 : vector<2x32xf32>
    %cst_108 = arith.constant 1.000000e+00 : f32
    %385 = vector.broadcast %cst_108 : f32 to vector<2x32xf32>
    %386 = arith.addf %385, %384 : vector<2x32xf32>
    %387 = arith.divf %385, %386 : vector<2x32xf32>
    %388 = vector.extract_strided_slice %374 {offsets = [0, 32], sizes = [2, 32], strides = [1, 1]} : vector<2x128xf32> to vector<2x32xf32>
    %389 = arith.negf %388 : vector<2x32xf32>
    %390 = math.exp %389 : vector<2x32xf32>
    %cst_109 = arith.constant 1.000000e+00 : f32
    %391 = vector.broadcast %cst_109 : f32 to vector<2x32xf32>
    %392 = arith.addf %391, %390 : vector<2x32xf32>
    %393 = arith.divf %391, %392 : vector<2x32xf32>
    %394 = vector.extract_strided_slice %374 {offsets = [0, 64], sizes = [2, 32], strides = [1, 1]} : vector<2x128xf32> to vector<2x32xf32>
    %395 = math.tanh %394 : vector<2x32xf32>
    %396 = vector.extract_strided_slice %374 {offsets = [0, 96], sizes = [2, 32], strides = [1, 1]} : vector<2x128xf32> to vector<2x32xf32>
    %397 = arith.negf %396 : vector<2x32xf32>
    %398 = math.exp %397 : vector<2x32xf32>
    %cst_110 = arith.constant 1.000000e+00 : f32
    %399 = vector.broadcast %cst_110 : f32 to vector<2x32xf32>
    %400 = arith.addf %399, %398 : vector<2x32xf32>
    %401 = arith.divf %399, %400 : vector<2x32xf32>
    %402 = arith.mulf %393, %332 : vector<2x32xf32>
    %403 = arith.mulf %387, %395 : vector<2x32xf32>
    %404 = arith.addf %402, %403 : vector<2x32xf32>
    %405 = math.tanh %404 : vector<2x32xf32>
    %406 = arith.mulf %401, %405 : vector<2x32xf32>
    %407 = vector.extract_strided_slice %381 {offsets = [0, 0], sizes = [2, 32], strides = [1, 1]} : vector<2x128xf32> to vector<2x32xf32>
    %408 = arith.negf %407 : vector<2x32xf32>
    %409 = math.exp %408 : vector<2x32xf32>
    %cst_111 = arith.constant 1.000000e+00 : f32
    %410 = vector.broadcast %cst_111 : f32 to vector<2x32xf32>
    %411 = arith.addf %410, %409 : vector<2x32xf32>
    %412 = arith.divf %410, %411 : vector<2x32xf32>
    %413 = vector.extract_strided_slice %381 {offsets = [0, 32], sizes = [2, 32], strides = [1, 1]} : vector<2x128xf32> to vector<2x32xf32>
    %414 = arith.negf %413 : vector<2x32xf32>
    %415 = math.exp %414 : vector<2x32xf32>
    %cst_112 = arith.constant 1.000000e+00 : f32
    %416 = vector.broadcast %cst_112 : f32 to vector<2x32xf32>
    %417 = arith.addf %416, %415 : vector<2x32xf32>
    %418 = arith.divf %416, %417 : vector<2x32xf32>
    %419 = vector.extract_strided_slice %381 {offsets = [0, 64], sizes = [2, 32], strides = [1, 1]} : vector<2x128xf32> to vector<2x32xf32>
    %420 = math.tanh %419 : vector<2x32xf32>
    %421 = vector.extract_strided_slice %381 {offsets = [0, 96], sizes = [2, 32], strides = [1, 1]} : vector<2x128xf32> to vector<2x32xf32>
    %422 = arith.negf %421 : vector<2x32xf32>
    %423 = math.exp %422 : vector<2x32xf32>
    %cst_113 = arith.constant 1.000000e+00 : f32
    %424 = vector.broadcast %cst_113 : f32 to vector<2x32xf32>
    %425 = arith.addf %424, %423 : vector<2x32xf32>
    %426 = arith.divf %424, %425 : vector<2x32xf32>
    %427 = arith.mulf %418, %357 : vector<2x32xf32>
    %428 = arith.mulf %412, %420 : vector<2x32xf32>
    %429 = arith.addf %427, %428 : vector<2x32xf32>
    %430 = math.tanh %429 : vector<2x32xf32>
    %431 = arith.mulf %426, %430 : vector<2x32xf32>
    %432 = arith.index_cast %c5_i32 : i32 to index
    %c0_114 = arith.constant 0 : index
    %c0_115 = arith.constant 0 : index
    %433 = vector.load %arg5[%432, %c0_114, %c0_115] : memref<8x2x32xf32, #tpu.memory_space<vmem>>, vector<1x2x32xf32>
    %434 = vector.shape_cast %433 : vector<1x2x32xf32> to vector<2x32xf32>
    %435 = vector.shape_cast %406 : vector<2x32xf32> to vector<1x2x32xf32>
    tpu.vector_store %arg5[%432, %c0_114, %c0_115], %435 {strides = array<i32>} : memref<8x2x32xf32, #tpu.memory_space<vmem>>, vector<1x2x32xf32>,
    %c7_i32_116 = arith.constant 7 : i32
    %436 = arith.subi %c7_i32_116, %c5_i32 : i32
    %437 = arith.index_cast %436 : i32 to index
    %c0_117 = arith.constant 0 : index
    %c0_118 = arith.constant 0 : index
    %438 = vector.load %arg6[%437, %c0_117, %c0_118] : memref<8x2x32xf32, #tpu.memory_space<vmem>>, vector<1x2x32xf32>
    %439 = vector.shape_cast %438 : vector<1x2x32xf32> to vector<2x32xf32>
    %440 = vector.shape_cast %431 : vector<2x32xf32> to vector<1x2x32xf32>
    tpu.vector_store %arg6[%437, %c0_117, %c0_118], %440 {strides = array<i32>} : memref<8x2x32xf32, #tpu.memory_space<vmem>>, vector<1x2x32xf32>,
    %c6_i32 = arith.constant 6 : i32
    %441 = arith.index_cast %c6_i32 : i32 to index
    %c0_119 = arith.constant 0 : index
    %c0_120 = arith.constant 0 : index
    %442 = vector.load %arg1[%441, %c0_119, %c0_120] : memref<8x2x128xf32, #tpu.memory_space<vmem>>, vector<1x2x128xf32>
    %443 = vector.shape_cast %442 : vector<1x2x128xf32> to vector<2x128xf32>
    %444 = arith.truncf %406 : vector<2x32xf32> to vector<2x32xbf16>
    %cst_121 = arith.constant dense<0.000000e+00> : vector<2x128xf32>
    %445 = tpu.matmul %444, %3, %cst_121 {dimension_numbers = #tpu.dot_dimension_numbers<[1], [0], [0], [1], [0, 0, 1, 1], [], []>} : vector<2x32xbf16>, vector<32x128xbf16>, vector<2x128xf32> -> vector<2x128xf32>
    %446 = arith.addf %443, %445 : vector<2x128xf32>
    %c7_i32_122 = arith.constant 7 : i32
    %447 = arith.subi %c7_i32_122, %c6_i32 : i32
    %448 = arith.index_cast %447 : i32 to index
    %c0_123 = arith.constant 0 : index
    %c0_124 = arith.constant 0 : index
    %449 = vector.load %arg2[%448, %c0_123, %c0_124] : memref<8x2x128xf32, #tpu.memory_space<vmem>>, vector<1x2x128xf32>
    %450 = vector.shape_cast %449 : vector<1x2x128xf32> to vector<2x128xf32>
    %451 = arith.truncf %431 : vector<2x32xf32> to vector<2x32xbf16>
    %cst_125 = arith.constant dense<0.000000e+00> : vector<2x128xf32>
    %452 = tpu.matmul %451, %4, %cst_125 {dimension_numbers = #tpu.dot_dimension_numbers<[1], [0], [0], [1], [0, 0, 1, 1], [], []>} : vector<2x32xbf16>, vector<32x128xbf16>, vector<2x128xf32> -> vector<2x128xf32>
    %453 = arith.addf %450, %452 : vector<2x128xf32>
    %454 = vector.extract_strided_slice %446 {offsets = [0, 0], sizes = [2, 32], strides = [1, 1]} : vector<2x128xf32> to vector<2x32xf32>
    %455 = arith.negf %454 : vector<2x32xf32>
    %456 = math.exp %455 : vector<2x32xf32>
    %cst_126 = arith.constant 1.000000e+00 : f32
    %457 = vector.broadcast %cst_126 : f32 to vector<2x32xf32>
    %458 = arith.addf %457, %456 : vector<2x32xf32>
    %459 = arith.divf %457, %458 : vector<2x32xf32>
    %460 = vector.extract_strided_slice %446 {offsets = [0, 32], sizes = [2, 32], strides = [1, 1]} : vector<2x128xf32> to vector<2x32xf32>
    %461 = arith.negf %460 : vector<2x32xf32>
    %462 = math.exp %461 : vector<2x32xf32>
    %cst_127 = arith.constant 1.000000e+00 : f32
    %463 = vector.broadcast %cst_127 : f32 to vector<2x32xf32>
    %464 = arith.addf %463, %462 : vector<2x32xf32>
    %465 = arith.divf %463, %464 : vector<2x32xf32>
    %466 = vector.extract_strided_slice %446 {offsets = [0, 64], sizes = [2, 32], strides = [1, 1]} : vector<2x128xf32> to vector<2x32xf32>
    %467 = math.tanh %466 : vector<2x32xf32>
    %468 = vector.extract_strided_slice %446 {offsets = [0, 96], sizes = [2, 32], strides = [1, 1]} : vector<2x128xf32> to vector<2x32xf32>
    %469 = arith.negf %468 : vector<2x32xf32>
    %470 = math.exp %469 : vector<2x32xf32>
    %cst_128 = arith.constant 1.000000e+00 : f32
    %471 = vector.broadcast %cst_128 : f32 to vector<2x32xf32>
    %472 = arith.addf %471, %470 : vector<2x32xf32>
    %473 = arith.divf %471, %472 : vector<2x32xf32>
    %474 = arith.mulf %465, %404 : vector<2x32xf32>
    %475 = arith.mulf %459, %467 : vector<2x32xf32>
    %476 = arith.addf %474, %475 : vector<2x32xf32>
    %477 = math.tanh %476 : vector<2x32xf32>
    %478 = arith.mulf %473, %477 : vector<2x32xf32>
    %479 = vector.extract_strided_slice %453 {offsets = [0, 0], sizes = [2, 32], strides = [1, 1]} : vector<2x128xf32> to vector<2x32xf32>
    %480 = arith.negf %479 : vector<2x32xf32>
    %481 = math.exp %480 : vector<2x32xf32>
    %cst_129 = arith.constant 1.000000e+00 : f32
    %482 = vector.broadcast %cst_129 : f32 to vector<2x32xf32>
    %483 = arith.addf %482, %481 : vector<2x32xf32>
    %484 = arith.divf %482, %483 : vector<2x32xf32>
    %485 = vector.extract_strided_slice %453 {offsets = [0, 32], sizes = [2, 32], strides = [1, 1]} : vector<2x128xf32> to vector<2x32xf32>
    %486 = arith.negf %485 : vector<2x32xf32>
    %487 = math.exp %486 : vector<2x32xf32>
    %cst_130 = arith.constant 1.000000e+00 : f32
    %488 = vector.broadcast %cst_130 : f32 to vector<2x32xf32>
    %489 = arith.addf %488, %487 : vector<2x32xf32>
    %490 = arith.divf %488, %489 : vector<2x32xf32>
    %491 = vector.extract_strided_slice %453 {offsets = [0, 64], sizes = [2, 32], strides = [1, 1]} : vector<2x128xf32> to vector<2x32xf32>
    %492 = math.tanh %491 : vector<2x32xf32>
    %493 = vector.extract_strided_slice %453 {offsets = [0, 96], sizes = [2, 32], strides = [1, 1]} : vector<2x128xf32> to vector<2x32xf32>
    %494 = arith.negf %493 : vector<2x32xf32>
    %495 = math.exp %494 : vector<2x32xf32>
    %cst_131 = arith.constant 1.000000e+00 : f32
    %496 = vector.broadcast %cst_131 : f32 to vector<2x32xf32>
    %497 = arith.addf %496, %495 : vector<2x32xf32>
    %498 = arith.divf %496, %497 : vector<2x32xf32>
    %499 = arith.mulf %490, %429 : vector<2x32xf32>
    %500 = arith.mulf %484, %492 : vector<2x32xf32>
    %501 = arith.addf %499, %500 : vector<2x32xf32>
    %502 = math.tanh %501 : vector<2x32xf32>
    %503 = arith.mulf %498, %502 : vector<2x32xf32>
    %504 = arith.index_cast %c6_i32 : i32 to index
    %c0_132 = arith.constant 0 : index
    %c0_133 = arith.constant 0 : index
    %505 = vector.load %arg5[%504, %c0_132, %c0_133] : memref<8x2x32xf32, #tpu.memory_space<vmem>>, vector<1x2x32xf32>
    %506 = vector.shape_cast %505 : vector<1x2x32xf32> to vector<2x32xf32>
    %507 = vector.shape_cast %478 : vector<2x32xf32> to vector<1x2x32xf32>
    tpu.vector_store %arg5[%504, %c0_132, %c0_133], %507 {strides = array<i32>} : memref<8x2x32xf32, #tpu.memory_space<vmem>>, vector<1x2x32xf32>,
    %c7_i32_134 = arith.constant 7 : i32
    %508 = arith.subi %c7_i32_134, %c6_i32 : i32
    %509 = arith.index_cast %508 : i32 to index
    %c0_135 = arith.constant 0 : index
    %c0_136 = arith.constant 0 : index
    %510 = vector.load %arg6[%509, %c0_135, %c0_136] : memref<8x2x32xf32, #tpu.memory_space<vmem>>, vector<1x2x32xf32>
    %511 = vector.shape_cast %510 : vector<1x2x32xf32> to vector<2x32xf32>
    %512 = vector.shape_cast %503 : vector<2x32xf32> to vector<1x2x32xf32>
    tpu.vector_store %arg6[%509, %c0_135, %c0_136], %512 {strides = array<i32>} : memref<8x2x32xf32, #tpu.memory_space<vmem>>, vector<1x2x32xf32>,
    %c7_i32_137 = arith.constant 7 : i32
    %513 = arith.index_cast %c7_i32_137 : i32 to index
    %c0_138 = arith.constant 0 : index
    %c0_139 = arith.constant 0 : index
    %514 = vector.load %arg1[%513, %c0_138, %c0_139] : memref<8x2x128xf32, #tpu.memory_space<vmem>>, vector<1x2x128xf32>
    %515 = vector.shape_cast %514 : vector<1x2x128xf32> to vector<2x128xf32>
    %516 = arith.truncf %478 : vector<2x32xf32> to vector<2x32xbf16>
    %cst_140 = arith.constant dense<0.000000e+00> : vector<2x128xf32>
    %517 = tpu.matmul %516, %3, %cst_140 {dimension_numbers = #tpu.dot_dimension_numbers<[1], [0], [0], [1], [0, 0, 1, 1], [], []>} : vector<2x32xbf16>, vector<32x128xbf16>, vector<2x128xf32> -> vector<2x128xf32>
    %518 = arith.addf %515, %517 : vector<2x128xf32>
    %c7_i32_141 = arith.constant 7 : i32
    %519 = arith.subi %c7_i32_141, %c7_i32_137 : i32
    %520 = arith.index_cast %519 : i32 to index
    %c0_142 = arith.constant 0 : index
    %c0_143 = arith.constant 0 : index
    %521 = vector.load %arg2[%520, %c0_142, %c0_143] : memref<8x2x128xf32, #tpu.memory_space<vmem>>, vector<1x2x128xf32>
    %522 = vector.shape_cast %521 : vector<1x2x128xf32> to vector<2x128xf32>
    %523 = arith.truncf %503 : vector<2x32xf32> to vector<2x32xbf16>
    %cst_144 = arith.constant dense<0.000000e+00> : vector<2x128xf32>
    %524 = tpu.matmul %523, %4, %cst_144 {dimension_numbers = #tpu.dot_dimension_numbers<[1], [0], [0], [1], [0, 0, 1, 1], [], []>} : vector<2x32xbf16>, vector<32x128xbf16>, vector<2x128xf32> -> vector<2x128xf32>
    %525 = arith.addf %522, %524 : vector<2x128xf32>
    %526 = vector.extract_strided_slice %518 {offsets = [0, 0], sizes = [2, 32], strides = [1, 1]} : vector<2x128xf32> to vector<2x32xf32>
    %527 = arith.negf %526 : vector<2x32xf32>
    %528 = math.exp %527 : vector<2x32xf32>
    %cst_145 = arith.constant 1.000000e+00 : f32
    %529 = vector.broadcast %cst_145 : f32 to vector<2x32xf32>
    %530 = arith.addf %529, %528 : vector<2x32xf32>
    %531 = arith.divf %529, %530 : vector<2x32xf32>
    %532 = vector.extract_strided_slice %518 {offsets = [0, 32], sizes = [2, 32], strides = [1, 1]} : vector<2x128xf32> to vector<2x32xf32>
    %533 = arith.negf %532 : vector<2x32xf32>
    %534 = math.exp %533 : vector<2x32xf32>
    %cst_146 = arith.constant 1.000000e+00 : f32
    %535 = vector.broadcast %cst_146 : f32 to vector<2x32xf32>
    %536 = arith.addf %535, %534 : vector<2x32xf32>
    %537 = arith.divf %535, %536 : vector<2x32xf32>
    %538 = vector.extract_strided_slice %518 {offsets = [0, 64], sizes = [2, 32], strides = [1, 1]} : vector<2x128xf32> to vector<2x32xf32>
    %539 = math.tanh %538 : vector<2x32xf32>
    %540 = vector.extract_strided_slice %518 {offsets = [0, 96], sizes = [2, 32], strides = [1, 1]} : vector<2x128xf32> to vector<2x32xf32>
    %541 = arith.negf %540 : vector<2x32xf32>
    %542 = math.exp %541 : vector<2x32xf32>
    %cst_147 = arith.constant 1.000000e+00 : f32
    %543 = vector.broadcast %cst_147 : f32 to vector<2x32xf32>
    %544 = arith.addf %543, %542 : vector<2x32xf32>
    %545 = arith.divf %543, %544 : vector<2x32xf32>
    %546 = arith.mulf %537, %476 : vector<2x32xf32>
    %547 = arith.mulf %531, %539 : vector<2x32xf32>
    %548 = arith.addf %546, %547 : vector<2x32xf32>
    %549 = math.tanh %548 : vector<2x32xf32>
    %550 = arith.mulf %545, %549 : vector<2x32xf32>
    %551 = vector.extract_strided_slice %525 {offsets = [0, 0], sizes = [2, 32], strides = [1, 1]} : vector<2x128xf32> to vector<2x32xf32>
    %552 = arith.negf %551 : vector<2x32xf32>
    %553 = math.exp %552 : vector<2x32xf32>
    %cst_148 = arith.constant 1.000000e+00 : f32
    %554 = vector.broadcast %cst_148 : f32 to vector<2x32xf32>
    %555 = arith.addf %554, %553 : vector<2x32xf32>
    %556 = arith.divf %554, %555 : vector<2x32xf32>
    %557 = vector.extract_strided_slice %525 {offsets = [0, 32], sizes = [2, 32], strides = [1, 1]} : vector<2x128xf32> to vector<2x32xf32>
    %558 = arith.negf %557 : vector<2x32xf32>
    %559 = math.exp %558 : vector<2x32xf32>
    %cst_149 = arith.constant 1.000000e+00 : f32
    %560 = vector.broadcast %cst_149 : f32 to vector<2x32xf32>
    %561 = arith.addf %560, %559 : vector<2x32xf32>
    %562 = arith.divf %560, %561 : vector<2x32xf32>
    %563 = vector.extract_strided_slice %525 {offsets = [0, 64], sizes = [2, 32], strides = [1, 1]} : vector<2x128xf32> to vector<2x32xf32>
    %564 = math.tanh %563 : vector<2x32xf32>
    %565 = vector.extract_strided_slice %525 {offsets = [0, 96], sizes = [2, 32], strides = [1, 1]} : vector<2x128xf32> to vector<2x32xf32>
    %566 = arith.negf %565 : vector<2x32xf32>
    %567 = math.exp %566 : vector<2x32xf32>
    %cst_150 = arith.constant 1.000000e+00 : f32
    %568 = vector.broadcast %cst_150 : f32 to vector<2x32xf32>
    %569 = arith.addf %568, %567 : vector<2x32xf32>
    %570 = arith.divf %568, %569 : vector<2x32xf32>
    %571 = arith.mulf %562, %501 : vector<2x32xf32>
    %572 = arith.mulf %556, %564 : vector<2x32xf32>
    %573 = arith.addf %571, %572 : vector<2x32xf32>
    %574 = math.tanh %573 : vector<2x32xf32>
    %575 = arith.mulf %570, %574 : vector<2x32xf32>
    %576 = arith.index_cast %c7_i32_137 : i32 to index
    %c0_151 = arith.constant 0 : index
    %c0_152 = arith.constant 0 : index
    %577 = vector.load %arg5[%576, %c0_151, %c0_152] : memref<8x2x32xf32, #tpu.memory_space<vmem>>, vector<1x2x32xf32>
    %578 = vector.shape_cast %577 : vector<1x2x32xf32> to vector<2x32xf32>
    %579 = vector.shape_cast %550 : vector<2x32xf32> to vector<1x2x32xf32>
    tpu.vector_store %arg5[%576, %c0_151, %c0_152], %579 {strides = array<i32>} : memref<8x2x32xf32, #tpu.memory_space<vmem>>, vector<1x2x32xf32>,
    %c7_i32_153 = arith.constant 7 : i32
    %580 = arith.subi %c7_i32_153, %c7_i32_137 : i32
    %581 = arith.index_cast %580 : i32 to index
    %c0_154 = arith.constant 0 : index
    %c0_155 = arith.constant 0 : index
    %582 = vector.load %arg6[%581, %c0_154, %c0_155] : memref<8x2x32xf32, #tpu.memory_space<vmem>>, vector<1x2x32xf32>
    %583 = vector.shape_cast %582 : vector<1x2x32xf32> to vector<2x32xf32>
    %584 = vector.shape_cast %575 : vector<2x32xf32> to vector<1x2x32xf32>
    tpu.vector_store %arg6[%581, %c0_154, %c0_155], %584 {strides = array<i32>} : memref<8x2x32xf32, #tpu.memory_space<vmem>>, vector<1x2x32xf32>,
    %c8_i32 = arith.constant 8 : i32
    %c0_156 = arith.constant 0 : index
    %c0_157 = arith.constant 0 : index
    %585 = vector.load %arg7[%c0_156, %c0_157] : memref<2x32xf32, #tpu.memory_space<vmem>>, vector<2x32xf32>
    tpu.vector_store %arg7[%c0_156, %c0_157], %550 {strides = array<i32>} : memref<2x32xf32, #tpu.memory_space<vmem>>, vector<2x32xf32>,
    %c0_158 = arith.constant 0 : index
    %c0_159 = arith.constant 0 : index
    %586 = vector.load %arg8[%c0_158, %c0_159] : memref<2x32xf32, #tpu.memory_space<vmem>>, vector<2x32xf32>
    tpu.vector_store %arg8[%c0_158, %c0_159], %548 {strides = array<i32>} : memref<2x32xf32, #tpu.memory_space<vmem>>, vector<2x32xf32>,
    %c0_160 = arith.constant 0 : index
    %c0_161 = arith.constant 0 : index
    %587 = vector.load %arg9[%c0_160, %c0_161] : memref<2x32xf32, #tpu.memory_space<vmem>>, vector<2x32xf32>
    tpu.vector_store %arg9[%c0_160, %c0_161], %575 {strides = array<i32>} : memref<2x32xf32, #tpu.memory_space<vmem>>, vector<2x32xf32>,
    %c0_162 = arith.constant 0 : index
    %c0_163 = arith.constant 0 : index
    %588 = vector.load %arg10[%c0_162, %c0_163] : memref<2x32xf32, #tpu.memory_space<vmem>>, vector<2x32xf32>
    tpu.vector_store %arg10[%c0_162, %c0_163], %573 {strides = array<i32>} : memref<2x32xf32, #tpu.memory_space<vmem>>, vector<2x32xf32>,
    return
  }
  func.func @transform_0(%arg0: i32) -> (i32, i32, i32) {
    %c0_i32 = arith.constant 0 : i32
    %c0_i32_0 = arith.constant 0 : i32
    %c0_i32_1 = arith.constant 0 : i32
    return %arg0, %c0_i32, %c0_i32_0 : i32, i32, i32
  }
  func.func @transform_1(%arg0: i32) -> (i32, i32, i32) {
    %c0_i32 = arith.constant 0 : i32
    %0 = arith.subi %c0_i32, %arg0 : i32
    %c0_i32_0 = arith.constant 0 : i32
    %c0_i32_1 = arith.constant 0 : i32
    %c0_i32_2 = arith.constant 0 : i32
    return %0, %c0_i32_0, %c0_i32_1 : i32, i32, i32
  }
  func.func @transform_2(%arg0: i32) -> (i32, i32) {
    %c0_i32 = arith.constant 0 : i32
    %c0_i32_0 = arith.constant 0 : i32
    %c0_i32_1 = arith.constant 0 : i32
    return %c0_i32, %c0_i32_0 : i32, i32
  }
  func.func @transform_3(%arg0: i32) -> (i32, i32) {
    %c0_i32 = arith.constant 0 : i32
    %c0_i32_0 = arith.constant 0 : i32
    %c0_i32_1 = arith.constant 0 : i32
    return %c0_i32, %c0_i32_0 : i32, i32
  }
  func.func @transform_4(%arg0: i32) -> (i32, i32, i32) {
    %c0_i32 = arith.constant 0 : i32
    %c0_i32_0 = arith.constant 0 : i32
    %c0_i32_1 = arith.constant 0 : i32
    return %arg0, %c0_i32, %c0_i32_0 : i32, i32, i32
  }
  func.func @transform_5(%arg0: i32) -> (i32, i32, i32) {
    %c0_i32 = arith.constant 0 : i32
    %0 = arith.subi %c0_i32, %arg0 : i32
    %c0_i32_0 = arith.constant 0 : i32
    %c0_i32_1 = arith.constant 0 : i32
    %c0_i32_2 = arith.constant 0 : i32
    return %0, %c0_i32_0, %c0_i32_1 : i32, i32, i32
  }
}

</mosaic_0001>

<llo_original>
// kernel: _lambda_.5
$region0: #{_lambda_.5}
  #allocation0 [shape = 'u32[]', space=smem, size = 0x4, offset = 0x4, fixed_abs, tag = 'smem constant byte address 0x4 - core index']
  #allocation1 [shape = 'u32[144,128]{1,0:T(1,128)}', space=vmem, size = 0x12000, scoped, tag = 'internal scratch']
  %s0 = inlined_call_operand.vmem [shape: f32[8,2,32], index: 0, kind: input, shape index: {}]
  %s1 = inlined_call_operand.vmem [shape: f32[8,2,32], index: 1, kind: input, shape index: {}]
  %s2 = inlined_call_operand.vmem [shape: f32[1,1,32], index: 2, kind: input, shape index: {}]
  %s3 = inlined_call_operand.vmem [shape: f32[1,1,32], index: 3, kind: input, shape index: {}]
  %s4 = inlined_call_operand.vmem [shape: bf16[32,128], index: 4, kind: input, shape index: {}]
  %s5 = inlined_call_operand.vmem [shape: bf16[32,128], index: 5, kind: input, shape index: {}]
  %s6 = inlined_call_operand.vmem [shape: f32[1,128], index: 6, kind: input, shape index: {}]
  %s7 = inlined_call_operand.vmem [shape: f32[2,128], index: 7, kind: output, shape index: {}]
  %s8 = sld [smem:[#allocation0]]
  $region38: #{_lambda_.5} parent=0
    _
  %s10 = ssub.s32 1, %s8
  %s11 = scalar_select 0, %s10, %s8
  // Predicated region
  $region2: #{_lambda_.5} parent=0 // pred_check
    _
  $region3: #{_lambda_.5} parent=0 // pred_check_branch
    %13 = sbr.rel (0) target = $region5
  $region4: #{_lambda_.5} parent=0 // pred_region
    _
  $region5: #{_lambda_.5} parent=0 // pred_fallthru
    _
  // Predicated region
  $region6: #{_lambda_.5} parent=0 // pred_check
    _
  $region7: #{_lambda_.5} parent=0 // pred_check_branch
    %15 = sbr.rel (0) target = $region9
  $region8: #{_lambda_.5} parent=0 // pred_region
    _
  $region9: #{_lambda_.5} parent=0 // pred_fallthru
    _
  // Predicated region
  $region10: #{_lambda_.5} parent=0 // pred_check
    _
  $region11: #{_lambda_.5} parent=0 // pred_check_branch
    %17 = sbr.rel (0) target = $region13
  $region12: #{_lambda_.5} parent=0 // pred_region
    _
  $region13: #{_lambda_.5} parent=0 // pred_fallthru
    _
  // Predicated region
  $region14: #{_lambda_.5} parent=0 // pred_check
    _
  $region15: #{_lambda_.5} parent=0 // pred_check_branch
    %19 = sbr.rel (0) target = $region17
  $region16: #{_lambda_.5} parent=0 // pred_region
    _
  $region17: #{_lambda_.5} parent=0 // pred_fallthru
    _
  // Predicated region
  $region18: #{_lambda_.5} parent=0 // pred_check
    _
  $region19: #{_lambda_.5} parent=0 // pred_check_branch
    %21 = sbr.rel (0) target = $region21
  $region20: #{_lambda_.5} parent=0 // pred_region
    _
  $region21: #{_lambda_.5} parent=0 // pred_fallthru
    _
  // Predicated region
  $region22: #{_lambda_.5} parent=0 // pred_check
    _
  $region23: #{_lambda_.5} parent=0 // pred_check_branch
    %23 = sbr.rel (0) target = $region25
  $region24: #{_lambda_.5} parent=0 // pred_region
    _
  $region25: #{_lambda_.5} parent=0 // pred_fallthru
    _
  // Predicated region
  $region26: #{_lambda_.5} parent=0 // pred_check
    _
  $region27: #{_lambda_.5} parent=0 // pred_check_branch
    %25 = sbr.rel (0) target = $region29
  $region28: #{_lambda_.5} parent=0 // pred_region
    _
  $region29: #{_lambda_.5} parent=0 // pred_fallthru
    _
  %v27 = vld [vmem:[%s0] sm:$0x3]
  %v28 = vld [vmem:[%s0 + $0x2] sm:$0x3]
  %v29 = vld [vmem:[%s0 + $0x4] sm:$0x3]
  %v30 = vld [vmem:[%s0 + $0x6] sm:$0x3]
  %v31 = vld [vmem:[%s0 + $0x8] sm:$0x3]
  %v32 = vld [vmem:[%s0 + $0xa] sm:$0x3]
  %v33 = vld [vmem:[%s0 + $0xc] sm:$0x3]
  %v34 = vld [vmem:[%s0 + $0xe] sm:$0x3]
  %v35 = vld [vmem:[%s1] sm:$0x3]
  %v36 = vld [vmem:[%s1 + $0x2] sm:$0x3]
  %v37 = vld [vmem:[%s1 + $0x4] sm:$0x3]
  %v38 = vld [vmem:[%s1 + $0x6] sm:$0x3]
  %v39 = vld [vmem:[%s1 + $0x8] sm:$0x3]
  %v40 = vld [vmem:[%s1 + $0xa] sm:$0x3]
  %v41 = vld [vmem:[%s1 + $0xc] sm:$0x3]
  %v42 = vld [vmem:[%s1 + $0xe] sm:$0x3]
  %v43 = vld [vmem:[%s2] sm:$0x1]
  %v45 = vlaneseq
  %v46 = vshrl.u32 %v45, 7
  %v47 = vsub.s32 0, %v46
  %v48 = vrot.slane %v43, %v47
  %v50 = vmul.f32 %v27, %v48
  %v51 = vmul.f32 %v28, %v48
  %v52 = vmul.f32 %v29, %v48
  %v53 = vmul.f32 %v30, %v48
  %v54 = vmul.f32 %v31, %v48
  %v55 = vmul.f32 %v32, %v48
  %v56 = vmul.f32 %v33, %v48
  %v57 = vmul.f32 %v34, %v48
  %vm58 = vcmask 254976
  %v59 = vsel %vm58, %v50, 0.0
  %60 = vadd.xlane.f32.xlu0 %v59
  %v61 = vpop.xlane.xlu0 %60
  %v62 = vsel %vm58, %v51, 0.0
  %63 = vadd.xlane.f32.xlu0 %v62
  %v64 = vpop.xlane.xlu0 %63
  %v65 = vsel %vm58, %v52, 0.0
  %66 = vadd.xlane.f32.xlu0 %v65
  %v67 = vpop.xlane.xlu0 %66
  %v68 = vsel %vm58, %v53, 0.0
  %69 = vadd.xlane.f32.xlu0 %v68
  %v70 = vpop.xlane.xlu0 %69
  %v71 = vsel %vm58, %v54, 0.0
  %72 = vadd.xlane.f32.xlu0 %v71
  %v73 = vpop.xlane.xlu0 %72
  %v74 = vsel %vm58, %v55, 0.0
  %75 = vadd.xlane.f32.xlu0 %v74
  %v76 = vpop.xlane.xlu0 %75
  %v77 = vsel %vm58, %v56, 0.0
  %78 = vadd.xlane.f32.xlu0 %v77
  %v79 = vpop.xlane.xlu0 %78
  %v80 = vsel %vm58, %v57, 0.0
  %81 = vadd.xlane.f32.xlu0 %v80
  %v82 = vpop.xlane.xlu0 %81
  %v83 = vld [vmem:[%s3] sm:$0x1]
  %v85 = vlaneseq
  %v86 = vshrl.u32 %v85, 7
  %v87 = vsub.s32 0, %v86
  %v88 = vrot.slane %v83, %v87
  %v90 = vmul.f32 %v35, %v88
  %v91 = vmul.f32 %v36, %v88
  %v92 = vmul.f32 %v37, %v88
  %v93 = vmul.f32 %v38, %v88
  %v94 = vmul.f32 %v39, %v88
  %v95 = vmul.f32 %v40, %v88
  %v96 = vmul.f32 %v41, %v88
  %v97 = vmul.f32 %v42, %v88
  %v98 = vsel %vm58, %v90, 0.0
  %99 = vadd.xlane.f32.xlu0 %v98
  %v100 = vpop.xlane.xlu0 %99
  %v101 = vsel %vm58, %v91, 0.0
  %102 = vadd.xlane.f32.xlu0 %v101
  %v103 = vpop.xlane.xlu0 %102
  %v104 = vsel %vm58, %v92, 0.0
  %105 = vadd.xlane.f32.xlu0 %v104
  %v106 = vpop.xlane.xlu0 %105
  %v107 = vsel %vm58, %v93, 0.0
  %108 = vadd.xlane.f32.xlu0 %v107
  %v109 = vpop.xlane.xlu0 %108
  %v110 = vsel %vm58, %v94, 0.0
  %111 = vadd.xlane.f32.xlu0 %v110
  %v112 = vpop.xlane.xlu0 %111
  %v113 = vsel %vm58, %v95, 0.0
  %114 = vadd.xlane.f32.xlu0 %v113
  %v115 = vpop.xlane.xlu0 %114
  %v116 = vsel %vm58, %v96, 0.0
  %117 = vadd.xlane.f32.xlu0 %v116
  %v118 = vpop.xlane.xlu0 %117
  %v119 = vsel %vm58, %v97, 0.0
  %120 = vadd.xlane.f32.xlu0 %v119
  %v121 = vpop.xlane.xlu0 %120
  %v122 = vadd.f32 %v61, %v100
  %v123 = vadd.f32 %v64, %v103
  %v124 = vadd.f32 %v67, %v106
  %v125 = vadd.f32 %v70, %v109
  %v126 = vadd.f32 %v73, %v112
  %v127 = vadd.f32 %v76, %v115
  %v128 = vadd.f32 %v79, %v118
  %v129 = vadd.f32 %v82, %v121
  %vm130 = vcmask 1041408
  %v131 = vsel %vm130, %v122, -inf
  %v132 = vsel %vm130, %v123, -inf
  %v133 = vsel %vm130, %v124, -inf
  %v134 = vsel %vm130, %v125, -inf
  %v135 = vsel %vm130, %v126, -inf
  %v136 = vmax.f32 %v131, %v135
  %v137 = vsel %vm130, %v127, -inf
  %v138 = vmax.f32 %v132, %v137
  %v139 = vsel %vm130, %v128, -inf
  %v140 = vmax.f32 %v133, %v139
  %v141 = vsel %vm130, %v129, -inf
  %v142 = vmax.f32 %v134, %v141
  %v143 = vmax.f32 %v136, %v138
  %v144 = vmax.f32 %v140, %v142
  %v145 = vmax.f32 %v143, %v144
  %v146 = vsub.f32 %v122, %v145
  %v147 = vsub.f32 %v123, %v145
  %v148 = vsub.f32 %v124, %v145
  %v149 = vsub.f32 %v125, %v145
  %v150 = vsub.f32 %v126, %v145
  %v151 = vsub.f32 %v127, %v145
  %v152 = vsub.f32 %v128, %v145
  %v153 = vsub.f32 %v129, %v145
  %v154 = vmul.f32 %v146, 1.442695
  %v155 = vpow.pop %v154
  %v156 = vmul.f32 %v147, 1.442695
  %v157 = vpow.pop %v156
  %v158 = vmul.f32 %v148, 1.442695
  %v159 = vpow.pop %v158
  %v160 = vmul.f32 %v149, 1.442695
  %v161 = vpow.pop %v160
  %v162 = vmul.f32 %v150, 1.442695
  %v163 = vpow.pop %v162
  %v164 = vmul.f32 %v151, 1.442695
  %v165 = vpow.pop %v164
  %v166 = vmul.f32 %v152, 1.442695
  %v167 = vpow.pop %v166
  %v168 = vmul.f32 %v153, 1.442695
  %v169 = vpow.pop %v168
  %v170 = vsel %vm130, %v155, 0.0
  %v171 = vsel %vm130, %v157, 0.0
  %v172 = vadd.f32 %v170, %v171
  %v173 = vsel %vm130, %v159, 0.0
  %v174 = vadd.f32 %v172, %v173
  %v175 = vsel %vm130, %v161, 0.0
  %v176 = vadd.f32 %v174, %v175
  %v177 = vsel %vm130, %v163, 0.0
  %v178 = vadd.f32 %v176, %v177
  %v179 = vsel %vm130, %v165, 0.0
  %v180 = vadd.f32 %v178, %v179
  %v181 = vsel %vm130, %v167, 0.0
  %v182 = vadd.f32 %v180, %v181
  %v183 = vsel %vm130, %v169, 0.0
  %v184 = vadd.f32 %v182, %v183
  %v185 = vrcp.pop %v184
  %v186 = vmul.f32 %v155, %v185
  %v187 = vmul.f32 %v157, %v185
  %v188 = vmul.f32 %v159, %v185
  %v189 = vmul.f32 %v161, %v185
  %v190 = vmul.f32 %v163, %v185
  %v191 = vmul.f32 %v165, %v185
  %v192 = vmul.f32 %v167, %v185
  %v193 = vmul.f32 %v169, %v185
  %v194 = vmul.f32 %v186, %v27
  %v195 = vmul.f32 %v187, %v28
  %v196 = vmul.f32 %v188, %v29
  %v197 = vmul.f32 %v189, %v30
  %v198 = vmul.f32 %v190, %v31
  %v199 = vmul.f32 %v191, %v32
  %v200 = vmul.f32 %v192, %v33
  %v201 = vmul.f32 %v193, %v34
  %v202 = vsel %vm58, %v194, 0.0
  %v203 = vsel %vm58, %v195, 0.0
  %v204 = vadd.f32 %v202, %v203
  %v205 = vsel %vm58, %v196, 0.0
  %v206 = vadd.f32 %v204, %v205
  %v207 = vsel %vm58, %v197, 0.0
  %v208 = vadd.f32 %v206, %v207
  %v209 = vsel %vm58, %v198, 0.0
  %v210 = vadd.f32 %v208, %v209
  %v211 = vsel %vm58, %v199, 0.0
  %v212 = vadd.f32 %v210, %v211
  %v213 = vsel %vm58, %v200, 0.0
  %v214 = vadd.f32 %v212, %v213
  %v215 = vsel %vm58, %v201, 0.0
  %v216 = vadd.f32 %v214, %v215
  %v217 = vmul.f32 %v186, %v35
  %v218 = vmul.f32 %v187, %v36
  %v219 = vmul.f32 %v188, %v37
  %v220 = vmul.f32 %v189, %v38
  %v221 = vmul.f32 %v190, %v39
  %v222 = vmul.f32 %v191, %v40
  %v223 = vmul.f32 %v192, %v41
  %v224 = vmul.f32 %v193, %v42
  %v225 = vsel %vm58, %v217, 0.0
  %v226 = vsel %vm58, %v218, 0.0
  %v227 = vadd.f32 %v225, %v226
  %v228 = vsel %vm58, %v219, 0.0
  %v229 = vadd.f32 %v227, %v228
  %v230 = vsel %vm58, %v220, 0.0
  %v231 = vadd.f32 %v229, %v230
  %v232 = vsel %vm58, %v221, 0.0
  %v233 = vadd.f32 %v231, %v232
  %v234 = vsel %vm58, %v222, 0.0
  %v235 = vadd.f32 %v233, %v234
  %v236 = vsel %vm58, %v223, 0.0
  %v237 = vadd.f32 %v235, %v236
  %v238 = vsel %vm58, %v224, 0.0
  %v239 = vadd.f32 %v237, %v238
  %v240 = vpack.c.bf16 %v216, %v216
  %v241 = vld [vmem:[%s4] sm:$0xf]
  %v242 = vld [vmem:[%s4 + $0x4] sm:$0xf]
  %v243 = vld [vmem:[%s4 + $0x8] sm:$0xf]
  %v244 = vld [vmem:[%s4 + $0xc] sm:$0xf]
  %v245 = vpack.c.bf16 %v239, %v239
  %v246 = vld [vmem:[%s5] sm:$0xf]
  %v247 = vld [vmem:[%s5 + $0x4] sm:$0xf]
  %v248 = vld [vmem:[%s5 + $0x8] sm:$0xf]
  %v249 = vld [vmem:[%s5 + $0xc] sm:$0xf]
  %v254 = vunpack.c.l.b16 %v246
  %v255 = vunpack.c.l.b16 %v247
  %v256 = vunpack.c.l.b16 %v248
  %v257 = vunpack.c.l.b16 %v249
  %v258 = vpack.c.b16 %v255, %v254
  %v259 = vpack.c.b16 %v257, %v256
  %vm262 = vcmask 261120
  %v264 = vsel %vm262, %v245, 0
  %266 = vmatprep.subr.bf16.mxu0 0
  %267 = vmatpush1.bf16.msra.mxu0 %v258
  %268 = vmatprep.subr.bf16.mxu0 0
  %269 = vmatpush1.bf16.msra.mxu0 %v259
  %270 = vmatprep.subr.bf16.mxu0 0
  %271 = vmatpush1.bf16.msra.mxu0 0
  %272 = vmatprep.subr.bf16.mxu0 0
  %273 = vmatpush1.bf16.msra.mxu0 0
  %274 = vmatprep.subr.bf16.mxu0 0
  %275 = vmatpush1.bf16.msra.mxu0 0
  %276 = vmatprep.subr.bf16.mxu0 0
  %277 = vmatpush1.bf16.msra.mxu0 0
  %278 = vmatprep.subr.bf16.mxu0 0
  %279 = vmatpush1.bf16.msra.mxu0 0
  %280 = vmatprep.subr.bf16.mxu0 0
  %281 = vmatpush1.bf16.msra.mxu0 0
  %282 = vmatprep.subr.bf16.mxu0 0
  %283 = vmatpush1.bf16.msra.mxu0 0
  %284 = vmatprep.subr.bf16.mxu0 0
  %285 = vmatpush1.bf16.msra.mxu0 0
  %286 = vmatprep.subr.bf16.mxu0 0
  %287 = vmatpush1.bf16.msra.mxu0 0
  %288 = vmatprep.subr.bf16.mxu0 0
  %289 = vmatpush1.bf16.msra.mxu0 0
  %290 = vmatprep.subr.bf16.mxu0 0
  %291 = vmatpush1.bf16.msra.mxu0 0
  %292 = vmatprep.subr.bf16.mxu0 0
  %293 = vmatpush1.bf16.msra.mxu0 0
  %294 = vmatprep.subr.bf16.mxu0 0
  %295 = vmatpush1.bf16.msra.mxu0 0
  %296 = vmatprep.subr.bf16.mxu0 0
  %297 = vmatpush1.bf16.msra.mxu0 0
  %298 = vmatprep.mubr.bf16.mxu0 0
  %299 = vmatmul.mubr.bf16.gmra.mrb[0].mxu0 %v264
  %v300 = vpop.f32.mrb[0].mxu0
  %v301 = vadd.f32 0.0, %v300
  %v302 = vpop.f32.mrb[0].mxu0
  %v303 = vpop.f32.mrb[0].mxu0
  %v304 = vpop.f32.mrb[0].mxu0
  %305 = vdwg.mxu0
  %v310 = vunpack.c.l.b16 %v241
  %v311 = vunpack.c.l.b16 %v242
  %v312 = vunpack.c.l.b16 %v243
  %v313 = vunpack.c.l.b16 %v244
  %v314 = vpack.c.b16 %v311, %v310
  %v315 = vpack.c.b16 %v313, %v312
  %v319 = vsel %vm262, %v240, 0
  %321 = vmatprep.subr.bf16.mxu0 0
  %322 = vmatpush1.bf16.msra.mxu0 %v314
  %323 = vmatprep.subr.bf16.mxu0 0
  %324 = vmatpush1.bf16.msra.mxu0 %v315
  %325 = vmatprep.subr.bf16.mxu0 0
  %326 = vmatpush1.bf16.msra.mxu0 0
  %327 = vmatprep.subr.bf16.mxu0 0
  %328 = vmatpush1.bf16.msra.mxu0 0
  %329 = vmatprep.subr.bf16.mxu0 0
  %330 = vmatpush1.bf16.msra.mxu0 0
  %331 = vmatprep.subr.bf16.mxu0 0
  %332 = vmatpush1.bf16.msra.mxu0 0
  %333 = vmatprep.subr.bf16.mxu0 0
  %334 = vmatpush1.bf16.msra.mxu0 0
  %335 = vmatprep.subr.bf16.mxu0 0
  %336 = vmatpush1.bf16.msra.mxu0 0
  %337 = vmatprep.subr.bf16.mxu0 0
  %338 = vmatpush1.bf16.msra.mxu0 0
  %339 = vmatprep.subr.bf16.mxu0 0
  %340 = vmatpush1.bf16.msra.mxu0 0
  %341 = vmatprep.subr.bf16.mxu0 0
  %342 = vmatpush1.bf16.msra.mxu0 0
  %343 = vmatprep.subr.bf16.mxu0 0
  %344 = vmatpush1.bf16.msra.mxu0 0
  %345 = vmatprep.subr.bf16.mxu0 0
  %346 = vmatpush1.bf16.msra.mxu0 0
  %347 = vmatprep.subr.bf16.mxu0 0
  %348 = vmatpush1.bf16.msra.mxu0 0
  %349 = vmatprep.subr.bf16.mxu0 0
  %350 = vmatpush1.bf16.msra.mxu0 0
  %351 = vmatprep.subr.bf16.mxu0 0
  %352 = vmatpush1.bf16.msra.mxu0 0
  %353 = vmatprep.mubr.bf16.mxu0 0
  %354 = vmatmul.mubr.bf16.gmra.mrb[0].mxu0 %v319
  %v355 = vpop.f32.mrb[0].mxu0
  %v356 = vadd.f32 %v301, %v355
  %v357 = vpop.f32.mrb[0].mxu0
  %v358 = vpop.f32.mrb[0].mxu0
  %v359 = vpop.f32.mrb[0].mxu0
  %360 = vdwg.mxu0
  %v361 = vld [vmem:[%s6] sm:$0x1]
  %v363 = vlaneseq
  %v364 = vshrl.u32 %v363, 7
  %v365 = vsub.s32 0, %v364
  %v366 = vrot.slane %v361, %v365
  %v368 = vadd.f32 %v356, %v366
  %369 = vst [vmem:[%s7] sm:$0x3] %v368
  // Predicated region
  $region30: #{_lambda_.5} parent=0 // pred_check
    _
  $region31: #{_lambda_.5} parent=0 // pred_check_branch
    %371 = sbr.rel (0) target = $region33
  $region32: #{_lambda_.5} parent=0 // pred_region
    _
  $region33: #{_lambda_.5} parent=0 // pred_fallthru
    _
  // Predicated region
  $region34: #{_lambda_.5} parent=0 // pred_check
    _
  $region35: #{_lambda_.5} parent=0 // pred_check_branch
    %373 = sbr.rel (0) target = $region37
  $region36: #{_lambda_.5} parent=0 // pred_region
    _
  $region37: #{_lambda_.5} parent=0 // pred_fallthru
    _

// kernel: _lambda_.3
$region0: #{_lambda_.3}
  #allocation0 [shape = 'u32[]', space=smem, size = 0x4, offset = 0x4, fixed_abs, tag = 'smem constant byte address 0x4 - core index']
  #allocation1 [shape = 'u32[144,128]{1,0:T(1,128)}', space=vmem, size = 0x12000, scoped, tag = 'internal scratch']
  #allocation2 [shape = 'f32[2,32]{1,0:T(2,128)}', space=vmem, size = 0x400, scoped, tag = 'scratch operand']
  #allocation3 [shape = 'f32[2,32]{1,0:T(2,128)}', space=vmem, size = 0x400, scoped, tag = 'scratch operand']
  #allocation4 [shape = 'f32[2,32]{1,0:T(2,128)}', space=vmem, size = 0x400, scoped, tag = 'scratch operand']
  #allocation5 [shape = 'f32[2,32]{1,0:T(2,128)}', space=vmem, size = 0x400, scoped, tag = 'scratch operand']
  %s0 = inlined_call_operand.vmem [shape: f32[8,2,128], index: 0, kind: input, shape index: {}]
  %s1 = inlined_call_operand.vmem [shape: f32[8,2,128], index: 1, kind: input, shape index: {}]
  %s2 = inlined_call_operand.vmem [shape: bf16[32,128], index: 2, kind: input, shape index: {}]
  %s3 = inlined_call_operand.vmem [shape: bf16[32,128], index: 3, kind: input, shape index: {}]
  %s4 = inlined_call_operand.vmem [shape: f32[8,2,32], index: 4, kind: output, shape index: {0}]
  %s5 = inlined_call_operand.vmem [shape: f32[8,2,32], index: 5, kind: output, shape index: {1}]
  %6 = xla_tuple %s4, %s5
  %s7 = sld [smem:[#allocation0]]
  $region38: #{_lambda_.3} parent=0
    _
  %s9 = ssub.s32 1, %s7
  %s10 = scalar_select 0, %s9, %s7
  // Predicated region
  $region2: #{_lambda_.3} parent=0 // pred_check
    _
  $region3: #{_lambda_.3} parent=0 // pred_check_branch
    %12 = sbr.rel (0) target = $region5
  $region4: #{_lambda_.3} parent=0 // pred_region
    _
  $region5: #{_lambda_.3} parent=0 // pred_fallthru
    _
  // Predicated region
  $region6: #{_lambda_.3} parent=0 // pred_check
    _
  $region7: #{_lambda_.3} parent=0 // pred_check_branch
    %14 = sbr.rel (0) target = $region9
  $region8: #{_lambda_.3} parent=0 // pred_region
    %s15 = ssub.s32 0, 0
    %s16 = smul.u32 8, %s15
    %p17 = scmp.lt.s32.totalorder %s16, 7
    %s18 = scalar_select %p17, %s16, 7
    %s19 = smul.addr %s18, 2
    %s20 = scalar_lea.vmem %s1, %s19
    %s21 = ssub.s32 0, 0
    %s22 = smul.u32 8, %s21
  $region9: #{_lambda_.3} parent=0 // pred_fallthru
    _
  // Predicated region
  $region10: #{_lambda_.3} parent=0 // pred_check
    _
  $region11: #{_lambda_.3} parent=0 // pred_check_branch
    %24 = sbr.rel (0) target = $region13
  $region12: #{_lambda_.3} parent=0 // pred_region
    _
  $region13: #{_lambda_.3} parent=0 // pred_fallthru
    _
  // Predicated region
  $region14: #{_lambda_.3} parent=0 // pred_check
    _
  $region15: #{_lambda_.3} parent=0 // pred_check_branch
    %26 = sbr.rel (0) target = $region17
  $region16: #{_lambda_.3} parent=0 // pred_region
    _
  $region17: #{_lambda_.3} parent=0 // pred_fallthru
    _
  %s27 = ssub.s32 0, 0
  %s28 = smul.u32 8, %s27
  %p29 = scmp.lt.s32.totalorder %s28, 7
  %s30 = scalar_select %p29, %s28, 7
  %s31 = smul.addr %s30, 2
  %s32 = scalar_lea.vmem %s1, %s31
  %s33 = ssub.s32 0, 0
  %s34 = smul.u32 8, %s33
  %p35 = scmp.lt.s32.totalorder %s34, 7
  %s36 = scalar_select %p35, %s34, 7
  %s37 = smul.addr %s36, 2
  %s38 = scalar_lea.vmem %s5, %s37
  %s39 = ssub.s32 0, 0
  %s40 = smul.u32 8, %s39
  %p41 = scmp.lt.s32.totalorder %s40, 7
  %s42 = scalar_select %p41, %s40, 7
  %s43 = smul.addr %s42, 2
  %s44 = scalar_lea.vmem %s1, %s43
  %s45 = ssub.s32 0, 0
  %s46 = smul.u32 8, %s45
  %s47 = ssub.s32 0, 0
  %s48 = smul.u32 8, %s47
  %p49 = scmp.lt.s32.totalorder %s48, 7
  %s50 = scalar_select %p49, %s48, 7
  %s51 = smul.addr %s50, 2
  %s52 = scalar_lea.vmem %s5, %s51
  %s53 = ssub.s32 0, 0
  %s54 = smul.u32 8, %s53
  %p56 = scmp.eq.s32.totalorder 0, 0
  // Predicated region
  $region18: #{_lambda_.3} parent=0 // pred_check
    %p57 = pneg %p56
  $region19: #{_lambda_.3} parent=0 // pred_check_branch
    %59 = sbr.rel (%p57) target = $region21
  $region20: #{_lambda_.3} parent=0 // pred_region
    %vm60 = vcmask 254976
    %61 = vst.msk [vmem:[#allocation2] sm:$0x3] %vm60, 0.0
    %62 = vst.msk [vmem:[#allocation3] sm:$0x3] %vm60, 0.0
    %63 = vst.msk [vmem:[#allocation4] sm:$0x3] %vm60, 0.0
    %64 = vst.msk [vmem:[#allocation5] sm:$0x3] %vm60, 0.0
  $region21: #{_lambda_.3} parent=0 // pred_fallthru
    _
  %v65 = vld [vmem:[%s2] sm:$0xf]
  %v66 = vld [vmem:[%s2 + $0x4] sm:$0xf]
  %v67 = vld [vmem:[%s2 + $0x8] sm:$0xf]
  %v68 = vld [vmem:[%s2 + $0xc] sm:$0xf]
  %v69 = vld [vmem:[%s3] sm:$0xf]
  %v70 = vld [vmem:[%s3 + $0x4] sm:$0xf]
  %v71 = vld [vmem:[%s3 + $0x8] sm:$0xf]
  %v72 = vld [vmem:[%s3 + $0xc] sm:$0xf]
  %v73 = vld [vmem:[#allocation2] sm:$0x3]
  %v74 = vld [vmem:[#allocation3] sm:$0x3]
  %v75 = vld [vmem:[#allocation4] sm:$0x3]
  %v76 = vld [vmem:[#allocation5] sm:$0x3]
  %v77 = vld [vmem:[%s0] sm:$0x3]
  %v78 = vpack.c.bf16 %v73, %v73
  %v83 = vunpack.c.l.b16 %v65
  %v84 = vunpack.c.l.b16 %v66
  %v85 = vunpack.c.l.b16 %v67
  %v86 = vunpack.c.l.b16 %v68
  %v87 = vpack.c.b16 %v84, %v83
  %v88 = vpack.c.b16 %v86, %v85
  %vm91 = vcmask 261120
  %v93 = vsel %vm91, %v78, 0
  %95 = vmatprep.subr.bf16.mxu0 0
  %96 = vmatpush1.bf16.msra.mxu0 %v87
  %97 = vmatprep.subr.bf16.mxu0 0
  %98 = vmatpush1.bf16.msra.mxu0 %v88
  %99 = vmatprep.subr.bf16.mxu0 0
  %100 = vmatpush1.bf16.msra.mxu0 0
  %101 = vmatprep.subr.bf16.mxu0 0
  %102 = vmatpush1.bf16.msra.mxu0 0
  %103 = vmatprep.subr.bf16.mxu0 0
  %104 = vmatpush1.bf16.msra.mxu0 0
  %105 = vmatprep.subr.bf16.mxu0 0
  %106 = vmatpush1.bf16.msra.mxu0 0
  %107 = vmatprep.subr.bf16.mxu0 0
  %108 = vmatpush1.bf16.msra.mxu0 0
  %109 = vmatprep.subr.bf16.mxu0 0
  %110 = vmatpush1.bf16.msra.mxu0 0
  %111 = vmatprep.subr.bf16.mxu0 0
  %112 = vmatpush1.bf16.msra.mxu0 0
  %113 = vmatprep.subr.bf16.mxu0 0
  %114 = vmatpush1.bf16.msra.mxu0 0
  %115 = vmatprep.subr.bf16.mxu0 0
  %116 = vmatpush1.bf16.msra.mxu0 0
  %117 = vmatprep.subr.bf16.mxu0 0
  %118 = vmatpush1.bf16.msra.mxu0 0
  %119 = vmatprep.subr.bf16.mxu0 0
  %120 = vmatpush1.bf16.msra.mxu0 0
  %121 = vmatprep.subr.bf16.mxu0 0
  %122 = vmatpush1.bf16.msra.mxu0 0
  %123 = vmatprep.subr.bf16.mxu0 0
  %124 = vmatpush1.bf16.msra.mxu0 0
  %125 = vmatprep.subr.bf16.mxu0 0
  %126 = vmatpush1.bf16.msra.mxu0 0
  %127 = vmatprep.mubr.bf16.mxu0 0
  %128 = vmatmul.mubr.bf16.gmra.mrb[0].mxu0 %v93
  %v129 = vpop.f32.mrb[0].mxu0
  %v130 = vadd.f32 0.0, %v129
  %v131 = vpop.f32.mrb[0].mxu0
  %v132 = vpop.f32.mrb[0].mxu0
  %v133 = vpop.f32.mrb[0].mxu0
  %134 = vdwg.mxu0
  %v135 = vadd.f32 %v77, %v130
  %s136 = scalar_lea.vmem %s44, 14
  %v137 = vld [vmem:[%s136] sm:$0x3]
  %v138 = vpack.c.bf16 %v75, %v75
  %v143 = vunpack.c.l.b16 %v69
  %v144 = vunpack.c.l.b16 %v70
  %v145 = vunpack.c.l.b16 %v71
  %v146 = vunpack.c.l.b16 %v72
  %v147 = vpack.c.b16 %v144, %v143
  %v148 = vpack.c.b16 %v146, %v145
  %v152 = vsel %vm91, %v138, 0
  %154 = vmatprep.subr.bf16.mxu0 0
  %155 = vmatpush1.bf16.msra.mxu0 %v147
  %156 = vmatprep.subr.bf16.mxu0 0
  %157 = vmatpush1.bf16.msra.mxu0 %v148
  %158 = vmatprep.subr.bf16.mxu0 0
  %159 = vmatpush1.bf16.msra.mxu0 0
  %160 = vmatprep.subr.bf16.mxu0 0
  %161 = vmatpush1.bf16.msra.mxu0 0
  %162 = vmatprep.subr.bf16.mxu0 0
  %163 = vmatpush1.bf16.msra.mxu0 0
  %164 = vmatprep.subr.bf16.mxu0 0
  %165 = vmatpush1.bf16.msra.mxu0 0
  %166 = vmatprep.subr.bf16.mxu0 0
  %167 = vmatpush1.bf16.msra.mxu0 0
  %168 = vmatprep.subr.bf16.mxu0 0
  %169 = vmatpush1.bf16.msra.mxu0 0
  %170 = vmatprep.subr.bf16.mxu0 0
  %171 = vmatpush1.bf16.msra.mxu0 0
  %172 = vmatprep.subr.bf16.mxu0 0
  %173 = vmatpush1.bf16.msra.mxu0 0
  %174 = vmatprep.subr.bf16.mxu0 0
  %175 = vmatpush1.bf16.msra.mxu0 0
  %176 = vmatprep.subr.bf16.mxu0 0
  %177 = vmatpush1.bf16.msra.mxu0 0
  %178 = vmatprep.subr.bf16.mxu0 0
  %179 = vmatpush1.bf16.msra.mxu0 0
  %180 = vmatprep.subr.bf16.mxu0 0
  %181 = vmatpush1.bf16.msra.mxu0 0
  %182 = vmatprep.subr.bf16.mxu0 0
  %183 = vmatpush1.bf16.msra.mxu0 0
  %184 = vmatprep.subr.bf16.mxu0 0
  %185 = vmatpush1.bf16.msra.mxu0 0
  %186 = vmatprep.mubr.bf16.mxu0 0
  %187 = vmatmul.mubr.bf16.gmra.mrb[0].mxu0 %v152
  %v188 = vpop.f32.mrb[0].mxu0
  %v189 = vadd.f32 0.0, %v188
  %v190 = vpop.f32.mrb[0].mxu0
  %v191 = vpop.f32.mrb[0].mxu0
  %v192 = vpop.f32.mrb[0].mxu0
  %193 = vdwg.mxu0
  %v194 = vadd.f32 %v137, %v189
  %v195 = vxor.u32 %v135, 2147483648
  %v196 = vmul.f32 %v195, 1.442695
  %v197 = vpow.pop %v196
  %v198 = vadd.f32 %v197, 1.0
  %v199 = vrcp.pop %v198
  %v200 = vmul.f32 1.0, %v199
  %v201 = vtanh.pop %v135
  %203 = vrot.lane.b32.xlu0 %v74, 32
  %v204 = vpop.permute.xlu0 %203
  %v206 = vmul.f32 %v200, %v204
  %208 = vrot.lane.b32.xlu0 %v201, 64
  %v209 = vpop.permute.xlu0 %208
  %v211 = vmul.f32 %v200, %v209
  %213 = vrot.lane.b32.xlu0 %v211, 32
  %v214 = vpop.permute.xlu0 %213
  %v216 = vadd.f32 %v206, %v214
  %v217 = vtanh.pop %v216
  %219 = vrot.lane.b32.xlu0 %v217, 64
  %v220 = vpop.permute.xlu0 %219
  %v222 = vmul.f32 %v200, %v220
  %v223 = vxor.u32 %v194, 2147483648
  %v224 = vmul.f32 %v223, 1.442695
  %v225 = vpow.pop %v224
  %v226 = vadd.f32 %v225, 1.0
  %v227 = vrcp.pop %v226
  %v228 = vmul.f32 1.0, %v227
  %v229 = vtanh.pop %v194
  %231 = vrot.lane.b32.xlu0 %v76, 32
  %v232 = vpop.permute.xlu0 %231
  %v234 = vmul.f32 %v228, %v232
  %236 = vrot.lane.b32.xlu0 %v229, 64
  %v237 = vpop.permute.xlu0 %236
  %v239 = vmul.f32 %v228, %v237
  %241 = vrot.lane.b32.xlu0 %v239, 32
  %v242 = vpop.permute.xlu0 %241
  %v244 = vadd.f32 %v234, %v242
  %v245 = vtanh.pop %v244
  %247 = vrot.lane.b32.xlu0 %v245, 64
  %v248 = vpop.permute.xlu0 %247
  %v250 = vmul.f32 %v228, %v248
  %252 = vrot.lane.b32.xlu0 %v222, 32
  %v253 = vpop.permute.xlu0 %252
  %vm255 = vcmask 254976
  %256 = vst.msk [vmem:[%s4] sm:$0x3] %vm255, %v253
  %258 = vrot.lane.b32.xlu0 %v250, 32
  %v259 = vpop.permute.xlu0 %258
  %s261 = scalar_lea.vmem %s52, 14
  %262 = vst.msk [vmem:[%s261] sm:$0x3] %vm255, %v259
  %s263 = scalar_lea.vmem %s0, 2
  %v264 = vld [vmem:[%s263] sm:$0x3]
  %v265 = vpack.c.bf16 %v222, %v222
  %267 = vrot.lane.b32.xlu0 %v265, 32
  %v268 = vpop.permute.xlu0 %267
  %v270 = vsel %vm91, %v268, 0
  %272 = vmatprep.subr.bf16.mxu0 0
  %273 = vmatpush1.bf16.msra.mxu0 %v87
  %274 = vmatprep.subr.bf16.mxu0 0
  %275 = vmatpush1.bf16.msra.mxu0 %v88
  %276 = vmatprep.subr.bf16.mxu0 0
  %277 = vmatpush1.bf16.msra.mxu0 0
  %278 = vmatprep.subr.bf16.mxu0 0
  %279 = vmatpush1.bf16.msra.mxu0 0
  %280 = vmatprep.subr.bf16.mxu0 0
  %281 = vmatpush1.bf16.msra.mxu0 0
  %282 = vmatprep.subr.bf16.mxu0 0
  %283 = vmatpush1.bf16.msra.mxu0 0
  %284 = vmatprep.subr.bf16.mxu0 0
  %285 = vmatpush1.bf16.msra.mxu0 0
  %286 = vmatprep.subr.bf16.mxu0 0
  %287 = vmatpush1.bf16.msra.mxu0 0
  %288 = vmatprep.subr.bf16.mxu0 0
  %289 = vmatpush1.bf16.msra.mxu0 0
  %290 = vmatprep.subr.bf16.mxu0 0
  %291 = vmatpush1.bf16.msra.mxu0 0
  %292 = vmatprep.subr.bf16.mxu0 0
  %293 = vmatpush1.bf16.msra.mxu0 0
  %294 = vmatprep.subr.bf16.mxu0 0
  %295 = vmatpush1.bf16.msra.mxu0 0
  %296 = vmatprep.subr.bf16.mxu0 0
  %297 = vmatpush1.bf16.msra.mxu0 0
  %298 = vmatprep.subr.bf16.mxu0 0
  %299 = vmatpush1.bf16.msra.mxu0 0
  %300 = vmatprep.subr.bf16.mxu0 0
  %301 = vmatpush1.bf16.msra.mxu0 0
  %302 = vmatprep.subr.bf16.mxu0 0
  %303 = vmatpush1.bf16.msra.mxu0 0
  %304 = vmatprep.mubr.bf16.mxu0 0
  %305 = vmatmul.mubr.bf16.gmra.mrb[0].mxu0 %v270
  %v306 = vpop.f32.mrb[0].mxu0
  %v307 = vadd.f32 0.0, %v306
  %v308 = vpop.f32.mrb[0].mxu0
  %v309 = vpop.f32.mrb[0].mxu0
  %v310 = vpop.f32.mrb[0].mxu0
  %311 = vdwg.mxu0
  %v312 = vadd.f32 %v264, %v307
  %s313 = scalar_lea.vmem %s44, 12
  %v314 = vld [vmem:[%s313] sm:$0x3]
  %v315 = vpack.c.bf16 %v250, %v250
  %317 = vrot.lane.b32.xlu0 %v315, 32
  %v318 = vpop.permute.xlu0 %317
  %v320 = vsel %vm91, %v318, 0
  %322 = vmatprep.subr.bf16.mxu0 0
  %323 = vmatpush1.bf16.msra.mxu0 %v147
  %324 = vmatprep.subr.bf16.mxu0 0
  %325 = vmatpush1.bf16.msra.mxu0 %v148
  %326 = vmatprep.subr.bf16.mxu0 0
  %327 = vmatpush1.bf16.msra.mxu0 0
  %328 = vmatprep.subr.bf16.mxu0 0
  %329 = vmatpush1.bf16.msra.mxu0 0
  %330 = vmatprep.subr.bf16.mxu0 0
  %331 = vmatpush1.bf16.msra.mxu0 0
  %332 = vmatprep.subr.bf16.mxu0 0
  %333 = vmatpush1.bf16.msra.mxu0 0
  %334 = vmatprep.subr.bf16.mxu0 0
  %335 = vmatpush1.bf16.msra.mxu0 0
  %336 = vmatprep.subr.bf16.mxu0 0
  %337 = vmatpush1.bf16.msra.mxu0 0
  %338 = vmatprep.subr.bf16.mxu0 0
  %339 = vmatpush1.bf16.msra.mxu0 0
  %340 = vmatprep.subr.bf16.mxu0 0
  %341 = vmatpush1.bf16.msra.mxu0 0
  %342 = vmatprep.subr.bf16.mxu0 0
  %343 = vmatpush1.bf16.msra.mxu0 0
  %344 = vmatprep.subr.bf16.mxu0 0
  %345 = vmatpush1.bf16.msra.mxu0 0
  %346 = vmatprep.subr.bf16.mxu0 0
  %347 = vmatpush1.bf16.msra.mxu0 0
  %348 = vmatprep.subr.bf16.mxu0 0
  %349 = vmatpush1.bf16.msra.mxu0 0
  %350 = vmatprep.subr.bf16.mxu0 0
  %351 = vmatpush1.bf16.msra.mxu0 0
  %352 = vmatprep.subr.bf16.mxu0 0
  %353 = vmatpush1.bf16.msra.mxu0 0
  %354 = vmatprep.mubr.bf16.mxu0 0
  %355 = vmatmul.mubr.bf16.gmra.mrb[0].mxu0 %v320
  %v356 = vpop.f32.mrb[0].mxu0
  %v357 = vadd.f32 0.0, %v356
  %v358 = vpop.f32.mrb[0].mxu0
  %v359 = vpop.f32.mrb[0].mxu0
  %v360 = vpop.f32.mrb[0].mxu0
  %361 = vdwg.mxu0
  %v362 = vadd.f32 %v314, %v357
  %v363 = vxor.u32 %v312, 2147483648
  %v364 = vmul.f32 %v363, 1.442695
  %v365 = vpow.pop %v364
  %v366 = vadd.f32 %v365, 1.0
  %v367 = vrcp.pop %v366
  %v368 = vmul.f32 1.0, %v367
  %v369 = vtanh.pop %v312
  %v370 = vmul.f32 %v368, %v216
  %372 = vrot.lane.b32.xlu0 %v369, 64
  %v373 = vpop.permute.xlu0 %372
  %v375 = vmul.f32 %v368, %v373
  %377 = vrot.lane.b32.xlu0 %v375, 32
  %v378 = vpop.permute.xlu0 %377
  %v380 = vadd.f32 %v370, %v378
  %v381 = vtanh.pop %v380
  %383 = vrot.lane.b32.xlu0 %v381, 64
  %v384 = vpop.permute.xlu0 %383
  %v386 = vmul.f32 %v368, %v384
  %v387 = vxor.u32 %v362, 2147483648
  %v388 = vmul.f32 %v387, 1.442695
  %v389 = vpow.pop %v388
  %v390 = vadd.f32 %v389, 1.0
  %v391 = vrcp.pop %v390
  %v392 = vmul.f32 1.0, %v391
  %v393 = vtanh.pop %v362
  %v394 = vmul.f32 %v392, %v244
  %396 = vrot.lane.b32.xlu0 %v393, 64
  %v397 = vpop.permute.xlu0 %396
  %v399 = vmul.f32 %v392, %v397
  %401 = vrot.lane.b32.xlu0 %v399, 32
  %v402 = vpop.permute.xlu0 %401
  %v404 = vadd.f32 %v394, %v402
  %v405 = vtanh.pop %v404
  %407 = vrot.lane.b32.xlu0 %v405, 64
  %v408 = vpop.permute.xlu0 %407
  %v410 = vmul.f32 %v392, %v408
  %412 = vrot.lane.b32.xlu0 %v386, 32
  %v413 = vpop.permute.xlu0 %412
  %s415 = scalar_lea.vmem %s4, 2
  %416 = vst.msk [vmem:[%s415] sm:$0x3] %vm255, %v413
  %418 = vrot.lane.b32.xlu0 %v410, 32
  %v419 = vpop.permute.xlu0 %418
  %s421 = scalar_lea.vmem %s52, 12
  %422 = vst.msk [vmem:[%s421] sm:$0x3] %vm255, %v419
  %s423 = scalar_lea.vmem %s0, 4
  %v424 = vld [vmem:[%s423] sm:$0x3]
  %v425 = vpack.c.bf16 %v386, %v386
  %427 = vrot.lane.b32.xlu0 %v425, 32
  %v428 = vpop.permute.xlu0 %427
  %v430 = vsel %vm91, %v428, 0
  %432 = vmatprep.subr.bf16.mxu0 0
  %433 = vmatpush1.bf16.msra.mxu0 %v87
  %434 = vmatprep.subr.bf16.mxu0 0
  %435 = vmatpush1.bf16.msra.mxu0 %v88
  %436 = vmatprep.subr.bf16.mxu0 0
  %437 = vmatpush1.bf16.msra.mxu0 0
  %438 = vmatprep.subr.bf16.mxu0 0
  %439 = vmatpush1.bf16.msra.mxu0 0
  %440 = vmatprep.subr.bf16.mxu0 0
  %441 = vmatpush1.bf16.msra.mxu0 0
  %442 = vmatprep.subr.bf16.mxu0 0
  %443 = vmatpush1.bf16.msra.mxu0 0
  %444 = vmatprep.subr.bf16.mxu0 0
  %445 = vmatpush1.bf16.msra.mxu0 0
  %446 = vmatprep.subr.bf16.mxu0 0
  %447 = vmatpush1.bf16.msra.mxu0 0
  %448 = vmatprep.subr.bf16.mxu0 0
  %449 = vmatpush1.bf16.msra.mxu0 0
  %450 = vmatprep.subr.bf16.mxu0 0
  %451 = vmatpush1.bf16.msra.mxu0 0
  %452 = vmatprep.subr.bf16.mxu0 0
  %453 = vmatpush1.bf16.msra.mxu0 0
  %454 = vmatprep.subr.bf16.mxu0 0
  %455 = vmatpush1.bf16.msra.mxu0 0
  %456 = vmatprep.subr.bf16.mxu0 0
  %457 = vmatpush1.bf16.msra.mxu0 0
  %458 = vmatprep.subr.bf16.mxu0 0
  %459 = vmatpush1.bf16.msra.mxu0 0
  %460 = vmatprep.subr.bf16.mxu0 0
  %461 = vmatpush1.bf16.msra.mxu0 0
  %462 = vmatprep.subr.bf16.mxu0 0
  %463 = vmatpush1.bf16.msra.mxu0 0
  %464 = vmatprep.mubr.bf16.mxu0 0
  %465 = vmatmul.mubr.bf16.gmra.mrb[0].mxu0 %v430
  %v466 = vpop.f32.mrb[0].mxu0
  %v467 = vadd.f32 0.0, %v466
  %v468 = vpop.f32.mrb[0].mxu0
  %v469 = vpop.f32.mrb[0].mxu0
  %v470 = vpop.f32.mrb[0].mxu0
  %471 = vdwg.mxu0
  %v472 = vadd.f32 %v424, %v467
  %s473 = scalar_lea.vmem %s44, 10
  %v474 = vld [vmem:[%s473] sm:$0x3]
  %v475 = vpack.c.bf16 %v410, %v410
  %477 = vrot.lane.b32.xlu0 %v475, 32
  %v478 = vpop.permute.xlu0 %477
  %v480 = vsel %vm91, %v478, 0
  %482 = vmatprep.subr.bf16.mxu0 0
  %483 = vmatpush1.bf16.msra.mxu0 %v147
  %484 = vmatprep.subr.bf16.mxu0 0
  %485 = vmatpush1.bf16.msra.mxu0 %v148
  %486 = vmatprep.subr.bf16.mxu0 0
  %487 = vmatpush1.bf16.msra.mxu0 0
  %488 = vmatprep.subr.bf16.mxu0 0
  %489 = vmatpush1.bf16.msra.mxu0 0
  %490 = vmatprep.subr.bf16.mxu0 0
  %491 = vmatpush1.bf16.msra.mxu0 0
  %492 = vmatprep.subr.bf16.mxu0 0
  %493 = vmatpush1.bf16.msra.mxu0 0
  %494 = vmatprep.subr.bf16.mxu0 0
  %495 = vmatpush1.bf16.msra.mxu0 0
  %496 = vmatprep.subr.bf16.mxu0 0
  %497 = vmatpush1.bf16.msra.mxu0 0
  %498 = vmatprep.subr.bf16.mxu0 0
  %499 = vmatpush1.bf16.msra.mxu0 0
  %500 = vmatprep.subr.bf16.mxu0 0
  %501 = vmatpush1.bf16.msra.mxu0 0
  %502 = vmatprep.subr.bf16.mxu0 0
  %503 = vmatpush1.bf16.msra.mxu0 0
  %504 = vmatprep.subr.bf16.mxu0 0
  %505 = vmatpush1.bf16.msra.mxu0 0
  %506 = vmatprep.subr.bf16.mxu0 0
  %507 = vmatpush1.bf16.msra.mxu0 0
  %508 = vmatprep.subr.bf16.mxu0 0
  %509 = vmatpush1.bf16.msra.mxu0 0
  %510 = vmatprep.subr.bf16.mxu0 0
  %511 = vmatpush1.bf16.msra.mxu0 0
  %512 = vmatprep.subr.bf16.mxu0 0
  %513 = vmatpush1.bf16.msra.mxu0 0
  %514 = vmatprep.mubr.bf16.mxu0 0
  %515 = vmatmul.mubr.bf16.gmra.mrb[0].mxu0 %v480
  %v516 = vpop.f32.mrb[0].mxu0
  %v517 = vadd.f32 0.0, %v516
  %v518 = vpop.f32.mrb[0].mxu0
  %v519 = vpop.f32.mrb[0].mxu0
  %v520 = vpop.f32.mrb[0].mxu0
  %521 = vdwg.mxu0
  %v522 = vadd.f32 %v474, %v517
  %v523 = vxor.u32 %v472, 2147483648
  %v524 = vmul.f32 %v523, 1.442695
  %v525 = vpow.pop %v524
  %v526 = vadd.f32 %v525, 1.0
  %v527 = vrcp.pop %v526
  %v528 = vmul.f32 1.0, %v527
  %v529 = vtanh.pop %v472
  %v530 = vmul.f32 %v528, %v380
  %532 = vrot.lane.b32.xlu0 %v529, 64
  %v533 = vpop.permute.xlu0 %532
  %v535 = vmul.f32 %v528, %v533
  %537 = vrot.lane.b32.xlu0 %v535, 32
  %v538 = vpop.permute.xlu0 %537
  %v540 = vadd.f32 %v530, %v538
  %v541 = vtanh.pop %v540
  %543 = vrot.lane.b32.xlu0 %v541, 64
  %v544 = vpop.permute.xlu0 %543
  %v546 = vmul.f32 %v528, %v544
  %v547 = vxor.u32 %v522, 2147483648
  %v548 = vmul.f32 %v547, 1.442695
  %v549 = vpow.pop %v548
  %v550 = vadd.f32 %v549, 1.0
  %v551 = vrcp.pop %v550
  %v552 = vmul.f32 1.0, %v551
  %v553 = vtanh.pop %v522
  %v554 = vmul.f32 %v552, %v404
  %556 = vrot.lane.b32.xlu0 %v553, 64
  %v557 = vpop.permute.xlu0 %556
  %v559 = vmul.f32 %v552, %v557
  %561 = vrot.lane.b32.xlu0 %v559, 32
  %v562 = vpop.permute.xlu0 %561
  %v564 = vadd.f32 %v554, %v562
  %v565 = vtanh.pop %v564
  %567 = vrot.lane.b32.xlu0 %v565, 64
  %v568 = vpop.permute.xlu0 %567
  %v570 = vmul.f32 %v552, %v568
  %572 = vrot.lane.b32.xlu0 %v546, 32
  %v573 = vpop.permute.xlu0 %572
  %s575 = scalar_lea.vmem %s4, 4
  %576 = vst.msk [vmem:[%s575] sm:$0x3] %vm255, %v573
  %578 = vrot.lane.b32.xlu0 %v570, 32
  %v579 = vpop.permute.xlu0 %578
  %s581 = scalar_lea.vmem %s52, 10
  %582 = vst.msk [vmem:[%s581] sm:$0x3] %vm255, %v579
  %s583 = scalar_lea.vmem %s0, 6
  %v584 = vld [vmem:[%s583] sm:$0x3]
  %v585 = vpack.c.bf16 %v546, %v546
  %587 = vrot.lane.b32.xlu0 %v585, 32
  %v588 = vpop.permute.xlu0 %587
  %v590 = vsel %vm91, %v588, 0
  %592 = vmatprep.subr.bf16.mxu0 0
  %593 = vmatpush1.bf16.msra.mxu0 %v87
  %594 = vmatprep.subr.bf16.mxu0 0
  %595 = vmatpush1.bf16.msra.mxu0 %v88
  %596 = vmatprep.subr.bf16.mxu0 0
  %597 = vmatpush1.bf16.msra.mxu0 0
  %598 = vmatprep.subr.bf16.mxu0 0
  %599 = vmatpush1.bf16.msra.mxu0 0
  %600 = vmatprep.subr.bf16.mxu0 0
  %601 = vmatpush1.bf16.msra.mxu0 0
  %602 = vmatprep.subr.bf16.mxu0 0
  %603 = vmatpush1.bf16.msra.mxu0 0
  %604 = vmatprep.subr.bf16.mxu0 0
  %605 = vmatpush1.bf16.msra.mxu0 0
  %606 = vmatprep.subr.bf16.mxu0 0
  %607 = vmatpush1.bf16.msra.mxu0 0
  %608 = vmatprep.subr.bf16.mxu0 0
  %609 = vmatpush1.bf16.msra.mxu0 0
  %610 = vmatprep.subr.bf16.mxu0 0
  %611 = vmatpush1.bf16.msra.mxu0 0
  %612 = vmatprep.subr.bf16.mxu0 0
  %613 = vmatpush1.bf16.msra.mxu0 0
  %614 = vmatprep.subr.bf16.mxu0 0
  %615 = vmatpush1.bf16.msra.mxu0 0
  %616 = vmatprep.subr.bf16.mxu0 0
  %617 = vmatpush1.bf16.msra.mxu0 0
  %618 = vmatprep.subr.bf16.mxu0 0
  %619 = vmatpush1.bf16.msra.mxu0 0
  %620 = vmatprep.subr.bf16.mxu0 0
  %621 = vmatpush1.bf16.msra.mxu0 0
  %622 = vmatprep.subr.bf16.mxu0 0
  %623 = vmatpush1.bf16.msra.mxu0 0
  %624 = vmatprep.mubr.bf16.mxu0 0
  %625 = vmatmul.mubr.bf16.gmra.mrb[0].mxu0 %v590
  %v626 = vpop.f32.mrb[0].mxu0
  %v627 = vadd.f32 0.0, %v626
  %v628 = vpop.f32.mrb[0].mxu0
  %v629 = vpop.f32.mrb[0].mxu0
  %v630 = vpop.f32.mrb[0].mxu0
  %631 = vdwg.mxu0
  %v632 = vadd.f32 %v584, %v627
  %s633 = scalar_lea.vmem %s44, 8
  %v634 = vld [vmem:[%s633] sm:$0x3]
  %v635 = vpack.c.bf16 %v570, %v570
  %637 = vrot.lane.b32.xlu0 %v635, 32
  %v638 = vpop.permute.xlu0 %637
  %v640 = vsel %vm91, %v638, 0
  %642 = vmatprep.subr.bf16.mxu0 0
  %643 = vmatpush1.bf16.msra.mxu0 %v147
  %644 = vmatprep.subr.bf16.mxu0 0
  %645 = vmatpush1.bf16.msra.mxu0 %v148
  %646 = vmatprep.subr.bf16.mxu0 0
  %647 = vmatpush1.bf16.msra.mxu0 0
  %648 = vmatprep.subr.bf16.mxu0 0
  %649 = vmatpush1.bf16.msra.mxu0 0
  %650 = vmatprep.subr.bf16.mxu0 0
  %651 = vmatpush1.bf16.msra.mxu0 0
  %652 = vmatprep.subr.bf16.mxu0 0
  %653 = vmatpush1.bf16.msra.mxu0 0
  %654 = vmatprep.subr.bf16.mxu0 0
  %655 = vmatpush1.bf16.msra.mxu0 0
  %656 = vmatprep.subr.bf16.mxu0 0
  %657 = vmatpush1.bf16.msra.mxu0 0
  %658 = vmatprep.subr.bf16.mxu0 0
  %659 = vmatpush1.bf16.msra.mxu0 0
  %660 = vmatprep.subr.bf16.mxu0 0
  %661 = vmatpush1.bf16.msra.mxu0 0
  %662 = vmatprep.subr.bf16.mxu0 0
  %663 = vmatpush1.bf16.msra.mxu0 0
  %664 = vmatprep.subr.bf16.mxu0 0
  %665 = vmatpush1.bf16.msra.mxu0 0
  %666 = vmatprep.subr.bf16.mxu0 0
  %667 = vmatpush1.bf16.msra.mxu0 0
  %668 = vmatprep.subr.bf16.mxu0 0
  %669 = vmatpush1.bf16.msra.mxu0 0
  %670 = vmatprep.subr.bf16.mxu0 0
  %671 = vmatpush1.bf16.msra.mxu0 0
  %672 = vmatprep.subr.bf16.mxu0 0
  %673 = vmatpush1.bf16.msra.mxu0 0
  %674 = vmatprep.mubr.bf16.mxu0 0
  %675 = vmatmul.mubr.bf16.gmra.mrb[0].mxu0 %v640
  %v676 = vpop.f32.mrb[0].mxu0
  %v677 = vadd.f32 0.0, %v676
  %v678 = vpop.f32.mrb[0].mxu0
  %v679 = vpop.f32.mrb[0].mxu0
  %v680 = vpop.f32.mrb[0].mxu0
  %681 = vdwg.mxu0
  %v682 = vadd.f32 %v634, %v677
  %v683 = vxor.u32 %v632, 2147483648
  %v684 = vmul.f32 %v683, 1.442695
  %v685 = vpow.pop %v684
  %v686 = vadd.f32 %v685, 1.0
  %v687 = vrcp.pop %v686
  %v688 = vmul.f32 1.0, %v687
  %v689 = vtanh.pop %v632
  %v690 = vmul.f32 %v688, %v540
  %692 = vrot.lane.b32.xlu0 %v689, 64
  %v693 = vpop.permute.xlu0 %692
  %v695 = vmul.f32 %v688, %v693
  %697 = vrot.lane.b32.xlu0 %v695, 32
  %v698 = vpop.permute.xlu0 %697
  %v700 = vadd.f32 %v690, %v698
  %v701 = vtanh.pop %v700
  %703 = vrot.lane.b32.xlu0 %v701, 64
  %v704 = vpop.permute.xlu0 %703
  %v706 = vmul.f32 %v688, %v704
  %v707 = vxor.u32 %v682, 2147483648
  %v708 = vmul.f32 %v707, 1.442695
  %v709 = vpow.pop %v708
  %v710 = vadd.f32 %v709, 1.0
  %v711 = vrcp.pop %v710
  %v712 = vmul.f32 1.0, %v711
  %v713 = vtanh.pop %v682
  %v714 = vmul.f32 %v712, %v564
  %716 = vrot.lane.b32.xlu0 %v713, 64
  %v717 = vpop.permute.xlu0 %716
  %v719 = vmul.f32 %v712, %v717
  %721 = vrot.lane.b32.xlu0 %v719, 32
  %v722 = vpop.permute.xlu0 %721
  %v724 = vadd.f32 %v714, %v722
  %v725 = vtanh.pop %v724
  %727 = vrot.lane.b32.xlu0 %v725, 64
  %v728 = vpop.permute.xlu0 %727
  %v730 = vmul.f32 %v712, %v728
  %732 = vrot.lane.b32.xlu0 %v706, 32
  %v733 = vpop.permute.xlu0 %732
  %s735 = scalar_lea.vmem %s4, 6
  %736 = vst.msk [vmem:[%s735] sm:$0x3] %vm255, %v733
  %738 = vrot.lane.b32.xlu0 %v730, 32
  %v739 = vpop.permute.xlu0 %738
  %s741 = scalar_lea.vmem %s52, 8
  %742 = vst.msk [vmem:[%s741] sm:$0x3] %vm255, %v739
  %s743 = scalar_lea.vmem %s0, 8
  %v744 = vld [vmem:[%s743] sm:$0x3]
  %v745 = vpack.c.bf16 %v706, %v706
  %747 = vrot.lane.b32.xlu0 %v745, 32
  %v748 = vpop.permute.xlu0 %747
  %v750 = vsel %vm91, %v748, 0
  %752 = vmatprep.subr.bf16.mxu0 0
  %753 = vmatpush1.bf16.msra.mxu0 %v87
  %754 = vmatprep.subr.bf16.mxu0 0
  %755 = vmatpush1.bf16.msra.mxu0 %v88
  %756 = vmatprep.subr.bf16.mxu0 0
  %757 = vmatpush1.bf16.msra.mxu0 0
  %758 = vmatprep.subr.bf16.mxu0 0
  %759 = vmatpush1.bf16.msra.mxu0 0
  %760 = vmatprep.subr.bf16.mxu0 0
  %761 = vmatpush1.bf16.msra.mxu0 0
  %762 = vmatprep.subr.bf16.mxu0 0
  %763 = vmatpush1.bf16.msra.mxu0 0
  %764 = vmatprep.subr.bf16.mxu0 0
  %765 = vmatpush1.bf16.msra.mxu0 0
  %766 = vmatprep.subr.bf16.mxu0 0
  %767 = vmatpush1.bf16.msra.mxu0 0
  %768 = vmatprep.subr.bf16.mxu0 0
  %769 = vmatpush1.bf16.msra.mxu0 0
  %770 = vmatprep.subr.bf16.mxu0 0
  %771 = vmatpush1.bf16.msra.mxu0 0
  %772 = vmatprep.subr.bf16.mxu0 0
  %773 = vmatpush1.bf16.msra.mxu0 0
  %774 = vmatprep.subr.bf16.mxu0 0
  %775 = vmatpush1.bf16.msra.mxu0 0
  %776 = vmatprep.subr.bf16.mxu0 0
  %777 = vmatpush1.bf16.msra.mxu0 0
  %778 = vmatprep.subr.bf16.mxu0 0
  %779 = vmatpush1.bf16.msra.mxu0 0
  %780 = vmatprep.subr.bf16.mxu0 0
  %781 = vmatpush1.bf16.msra.mxu0 0
  %782 = vmatprep.subr.bf16.mxu0 0
  %783 = vmatpush1.bf16.msra.mxu0 0
  %784 = vmatprep.mubr.bf16.mxu0 0
  %785 = vmatmul.mubr.bf16.gmra.mrb[0].mxu0 %v750
  %v786 = vpop.f32.mrb[0].mxu0
  %v787 = vadd.f32 0.0, %v786
  %v788 = vpop.f32.mrb[0].mxu0
  %v789 = vpop.f32.mrb[0].mxu0
  %v790 = vpop.f32.mrb[0].mxu0
  %791 = vdwg.mxu0
  %v792 = vadd.f32 %v744, %v787
  %s793 = scalar_lea.vmem %s44, 6
  %v794 = vld [vmem:[%s793] sm:$0x3]
  %v795 = vpack.c.bf16 %v730, %v730
  %797 = vrot.lane.b32.xlu0 %v795, 32
  %v798 = vpop.permute.xlu0 %797
  %v800 = vsel %vm91, %v798, 0
  %802 = vmatprep.subr.bf16.mxu0 0
  %803 = vmatpush1.bf16.msra.mxu0 %v147
  %804 = vmatprep.subr.bf16.mxu0 0
  %805 = vmatpush1.bf16.msra.mxu0 %v148
  %806 = vmatprep.subr.bf16.mxu0 0
  %807 = vmatpush1.bf16.msra.mxu0 0
  %808 = vmatprep.subr.bf16.mxu0 0
  %809 = vmatpush1.bf16.msra.mxu0 0
  %810 = vmatprep.subr.bf16.mxu0 0
  %811 = vmatpush1.bf16.msra.mxu0 0
  %812 = vmatprep.subr.bf16.mxu0 0
  %813 = vmatpush1.bf16.msra.mxu0 0
  %814 = vmatprep.subr.bf16.mxu0 0
  %815 = vmatpush1.bf16.msra.mxu0 0
  %816 = vmatprep.subr.bf16.mxu0 0
  %817 = vmatpush1.bf16.msra.mxu0 0
  %818 = vmatprep.subr.bf16.mxu0 0
  %819 = vmatpush1.bf16.msra.mxu0 0
  %820 = vmatprep.subr.bf16.mxu0 0
  %821 = vmatpush1.bf16.msra.mxu0 0
  %822 = vmatprep.subr.bf16.mxu0 0
  %823 = vmatpush1.bf16.msra.mxu0 0
  %824 = vmatprep.subr.bf16.mxu0 0
  %825 = vmatpush1.bf16.msra.mxu0 0
  %826 = vmatprep.subr.bf16.mxu0 0
  %827 = vmatpush1.bf16.msra.mxu0 0
  %828 = vmatprep.subr.bf16.mxu0 0
  %829 = vmatpush1.bf16.msra.mxu0 0
  %830 = vmatprep.subr.bf16.mxu0 0
  %831 = vmatpush1.bf16.msra.mxu0 0
  %832 = vmatprep.subr.bf16.mxu0 0
  %833 = vmatpush1.bf16.msra.mxu0 0
  %834 = vmatprep.mubr.bf16.mxu0 0
  %835 = vmatmul.mubr.bf16.gmra.mrb[0].mxu0 %v800
  %v836 = vpop.f32.mrb[0].mxu0
  %v837 = vadd.f32 0.0, %v836
  %v838 = vpop.f32.mrb[0].mxu0
  %v839 = vpop.f32.mrb[0].mxu0
  %v840 = vpop.f32.mrb[0].mxu0
  %841 = vdwg.mxu0
  %v842 = vadd.f32 %v794, %v837
  %v843 = vxor.u32 %v792, 2147483648
  %v844 = vmul.f32 %v843, 1.442695
  %v845 = vpow.pop %v844
  %v846 = vadd.f32 %v845, 1.0
  %v847 = vrcp.pop %v846
  %v848 = vmul.f32 1.0, %v847
  %v849 = vtanh.pop %v792
  %v850 = vmul.f32 %v848, %v700
  %852 = vrot.lane.b32.xlu0 %v849, 64
  %v853 = vpop.permute.xlu0 %852
  %v855 = vmul.f32 %v848, %v853
  %857 = vrot.lane.b32.xlu0 %v855, 32
  %v858 = vpop.permute.xlu0 %857
  %v860 = vadd.f32 %v850, %v858
  %v861 = vtanh.pop %v860
  %863 = vrot.lane.b32.xlu0 %v861, 64
  %v864 = vpop.permute.xlu0 %863
  %v866 = vmul.f32 %v848, %v864
  %v867 = vxor.u32 %v842, 2147483648
  %v868 = vmul.f32 %v867, 1.442695
  %v869 = vpow.pop %v868
  %v870 = vadd.f32 %v869, 1.0
  %v871 = vrcp.pop %v870
  %v872 = vmul.f32 1.0, %v871
  %v873 = vtanh.pop %v842
  %v874 = vmul.f32 %v872, %v724
  %876 = vrot.lane.b32.xlu0 %v873, 64
  %v877 = vpop.permute.xlu0 %876
  %v879 = vmul.f32 %v872, %v877
  %881 = vrot.lane.b32.xlu0 %v879, 32
  %v882 = vpop.permute.xlu0 %881
  %v884 = vadd.f32 %v874, %v882
  %v885 = vtanh.pop %v884
  %887 = vrot.lane.b32.xlu0 %v885, 64
  %v888 = vpop.permute.xlu0 %887
  %v890 = vmul.f32 %v872, %v888
  %892 = vrot.lane.b32.xlu0 %v866, 32
  %v893 = vpop.permute.xlu0 %892
  %s895 = scalar_lea.vmem %s4, 8
  %896 = vst.msk [vmem:[%s895] sm:$0x3] %vm255, %v893
  %898 = vrot.lane.b32.xlu0 %v890, 32
  %v899 = vpop.permute.xlu0 %898
  %s901 = scalar_lea.vmem %s52, 6
  %902 = vst.msk [vmem:[%s901] sm:$0x3] %vm255, %v899
  %s903 = scalar_lea.vmem %s0, 10
  %v904 = vld [vmem:[%s903] sm:$0x3]
  %v905 = vpack.c.bf16 %v866, %v866
  %907 = vrot.lane.b32.xlu0 %v905, 32
  %v908 = vpop.permute.xlu0 %907
  %v910 = vsel %vm91, %v908, 0
  %912 = vmatprep.subr.bf16.mxu0 0
  %913 = vmatpush1.bf16.msra.mxu0 %v87
  %914 = vmatprep.subr.bf16.mxu0 0
  %915 = vmatpush1.bf16.msra.mxu0 %v88
  %916 = vmatprep.subr.bf16.mxu0 0
  %917 = vmatpush1.bf16.msra.mxu0 0
  %918 = vmatprep.subr.bf16.mxu0 0
  %919 = vmatpush1.bf16.msra.mxu0 0
  %920 = vmatprep.subr.bf16.mxu0 0
  %921 = vmatpush1.bf16.msra.mxu0 0
  %922 = vmatprep.subr.bf16.mxu0 0
  %923 = vmatpush1.bf16.msra.mxu0 0
  %924 = vmatprep.subr.bf16.mxu0 0
  %925 = vmatpush1.bf16.msra.mxu0 0
  %926 = vmatprep.subr.bf16.mxu0 0
  %927 = vmatpush1.bf16.msra.mxu0 0
  %928 = vmatprep.subr.bf16.mxu0 0
  %929 = vmatpush1.bf16.msra.mxu0 0
  %930 = vmatprep.subr.bf16.mxu0 0
  %931 = vmatpush1.bf16.msra.mxu0 0
  %932 = vmatprep.subr.bf16.mxu0 0
  %933 = vmatpush1.bf16.msra.mxu0 0
  %934 = vmatprep.subr.bf16.mxu0 0
  %935 = vmatpush1.bf16.msra.mxu0 0
  %936 = vmatprep.subr.bf16.mxu0 0
  %937 = vmatpush1.bf16.msra.mxu0 0
  %938 = vmatprep.subr.bf16.mxu0 0
  %939 = vmatpush1.bf16.msra.mxu0 0
  %940 = vmatprep.subr.bf16.mxu0 0
  %941 = vmatpush1.bf16.msra.mxu0 0
  %942 = vmatprep.subr.bf16.mxu0 0
  %943 = vmatpush1.bf16.msra.mxu0 0
  %944 = vmatprep.mubr.bf16.mxu0 0
  %945 = vmatmul.mubr.bf16.gmra.mrb[0].mxu0 %v910
  %v946 = vpop.f32.mrb[0].mxu0
  %v947 = vadd.f32 0.0, %v946
  %v948 = vpop.f32.mrb[0].mxu0
  %v949 = vpop.f32.mrb[0].mxu0
  %v950 = vpop.f32.mrb[0].mxu0
  %951 = vdwg.mxu0
  %v952 = vadd.f32 %v904, %v947
  %s953 = scalar_lea.vmem %s44, 4
  %v954 = vld [vmem:[%s953] sm:$0x3]
  %v955 = vpack.c.bf16 %v890, %v890
  %957 = vrot.lane.b32.xlu0 %v955, 32
  %v958 = vpop.permute.xlu0 %957
  %v960 = vsel %vm91, %v958, 0
  %962 = vmatprep.subr.bf16.mxu0 0
  %963 = vmatpush1.bf16.msra.mxu0 %v147
  %964 = vmatprep.subr.bf16.mxu0 0
  %965 = vmatpush1.bf16.msra.mxu0 %v148
  %966 = vmatprep.subr.bf16.mxu0 0
  %967 = vmatpush1.bf16.msra.mxu0 0
  %968 = vmatprep.subr.bf16.mxu0 0
  %969 = vmatpush1.bf16.msra.mxu0 0
  %970 = vmatprep.subr.bf16.mxu0 0
  %971 = vmatpush1.bf16.msra.mxu0 0
  %972 = vmatprep.subr.bf16.mxu0 0
  %973 = vmatpush1.bf16.msra.mxu0 0
  %974 = vmatprep.subr.bf16.mxu0 0
  %975 = vmatpush1.bf16.msra.mxu0 0
  %976 = vmatprep.subr.bf16.mxu0 0
  %977 = vmatpush1.bf16.msra.mxu0 0
  %978 = vmatprep.subr.bf16.mxu0 0
  %979 = vmatpush1.bf16.msra.mxu0 0
  %980 = vmatprep.subr.bf16.mxu0 0
  %981 = vmatpush1.bf16.msra.mxu0 0
  %982 = vmatprep.subr.bf16.mxu0 0
  %983 = vmatpush1.bf16.msra.mxu0 0
  %984 = vmatprep.subr.bf16.mxu0 0
  %985 = vmatpush1.bf16.msra.mxu0 0
  %986 = vmatprep.subr.bf16.mxu0 0
  %987 = vmatpush1.bf16.msra.mxu0 0
  %988 = vmatprep.subr.bf16.mxu0 0
  %989 = vmatpush1.bf16.msra.mxu0 0
  %990 = vmatprep.subr.bf16.mxu0 0
  %991 = vmatpush1.bf16.msra.mxu0 0
  %992 = vmatprep.subr.bf16.mxu0 0
  %993 = vmatpush1.bf16.msra.mxu0 0
  %994 = vmatprep.mubr.bf16.mxu0 0
  %995 = vmatmul.mubr.bf16.gmra.mrb[0].mxu0 %v960
  %v996 = vpop.f32.mrb[0].mxu0
  %v997 = vadd.f32 0.0, %v996
  %v998 = vpop.f32.mrb[0].mxu0
  %v999 = vpop.f32.mrb[0].mxu0
  %v1000 = vpop.f32.mrb[0].mxu0
  %1001 = vdwg.mxu0
  %v1002 = vadd.f32 %v954, %v997
  %v1003 = vxor.u32 %v952, 2147483648
  %v1004 = vmul.f32 %v1003, 1.442695
  %v1005 = vpow.pop %v1004
  %v1006 = vadd.f32 %v1005, 1.0
  %v1007 = vrcp.pop %v1006
  %v1008 = vmul.f32 1.0, %v1007
  %v1009 = vtanh.pop %v952
  %v1010 = vmul.f32 %v1008, %v860
  %1012 = vrot.lane.b32.xlu0 %v1009, 64
  %v1013 = vpop.permute.xlu0 %1012
  %v1015 = vmul.f32 %v1008, %v1013
  %1017 = vrot.lane.b32.xlu0 %v1015, 32
  %v1018 = vpop.permute.xlu0 %1017
  %v1020 = vadd.f32 %v1010, %v1018
  %v1021 = vtanh.pop %v1020
  %1023 = vrot.lane.b32.xlu0 %v1021, 64
  %v1024 = vpop.permute.xlu0 %1023
  %v1026 = vmul.f32 %v1008, %v1024
  %v1027 = vxor.u32 %v1002, 2147483648
  %v1028 = vmul.f32 %v1027, 1.442695
  %v1029 = vpow.pop %v1028
  %v1030 = vadd.f32 %v1029, 1.0
  %v1031 = vrcp.pop %v1030
  %v1032 = vmul.f32 1.0, %v1031
  %v1033 = vtanh.pop %v1002
  %v1034 = vmul.f32 %v1032, %v884
  %1036 = vrot.lane.b32.xlu0 %v1033, 64
  %v1037 = vpop.permute.xlu0 %1036
  %v1039 = vmul.f32 %v1032, %v1037
  %1041 = vrot.lane.b32.xlu0 %v1039, 32
  %v1042 = vpop.permute.xlu0 %1041
  %v1044 = vadd.f32 %v1034, %v1042
  %v1045 = vtanh.pop %v1044
  %1047 = vrot.lane.b32.xlu0 %v1045, 64
  %v1048 = vpop.permute.xlu0 %1047
  %v1050 = vmul.f32 %v1032, %v1048
  %1052 = vrot.lane.b32.xlu0 %v1026, 32
  %v1053 = vpop.permute.xlu0 %1052
  %s1055 = scalar_lea.vmem %s4, 10
  %1056 = vst.msk [vmem:[%s1055] sm:$0x3] %vm255, %v1053
  %1058 = vrot.lane.b32.xlu0 %v1050, 32
  %v1059 = vpop.permute.xlu0 %1058
  %s1061 = scalar_lea.vmem %s52, 4
  %1062 = vst.msk [vmem:[%s1061] sm:$0x3] %vm255, %v1059
  %s1063 = scalar_lea.vmem %s0, 12
  %v1064 = vld [vmem:[%s1063] sm:$0x3]
  %v1065 = vpack.c.bf16 %v1026, %v1026
  %1067 = vrot.lane.b32.xlu0 %v1065, 32
  %v1068 = vpop.permute.xlu0 %1067
  %v1070 = vsel %vm91, %v1068, 0
  %1072 = vmatprep.subr.bf16.mxu0 0
  %1073 = vmatpush1.bf16.msra.mxu0 %v87
  %1074 = vmatprep.subr.bf16.mxu0 0
  %1075 = vmatpush1.bf16.msra.mxu0 %v88
  %1076 = vmatprep.subr.bf16.mxu0 0
  %1077 = vmatpush1.bf16.msra.mxu0 0
  %1078 = vmatprep.subr.bf16.mxu0 0
  %1079 = vmatpush1.bf16.msra.mxu0 0
  %1080 = vmatprep.subr.bf16.mxu0 0
  %1081 = vmatpush1.bf16.msra.mxu0 0
  %1082 = vmatprep.subr.bf16.mxu0 0
  %1083 = vmatpush1.bf16.msra.mxu0 0
  %1084 = vmatprep.subr.bf16.mxu0 0
  %1085 = vmatpush1.bf16.msra.mxu0 0
  %1086 = vmatprep.subr.bf16.mxu0 0
  %1087 = vmatpush1.bf16.msra.mxu0 0
  %1088 = vmatprep.subr.bf16.mxu0 0
  %1089 = vmatpush1.bf16.msra.mxu0 0
  %1090 = vmatprep.subr.bf16.mxu0 0
  %1091 = vmatpush1.bf16.msra.mxu0 0
  %1092 = vmatprep.subr.bf16.mxu0 0
  %1093 = vmatpush1.bf16.msra.mxu0 0
  %1094 = vmatprep.subr.bf16.mxu0 0
  %1095 = vmatpush1.bf16.msra.mxu0 0
  %1096 = vmatprep.subr.bf16.mxu0 0
  %1097 = vmatpush1.bf16.msra.mxu0 0
  %1098 = vmatprep.subr.bf16.mxu0 0
  %1099 = vmatpush1.bf16.msra.mxu0 0
  %1100 = vmatprep.subr.bf16.mxu0 0
  %1101 = vmatpush1.bf16.msra.mxu0 0
  %1102 = vmatprep.subr.bf16.mxu0 0
  %1103 = vmatpush1.bf16.msra.mxu0 0
  %1104 = vmatprep.mubr.bf16.mxu0 0
  %1105 = vmatmul.mubr.bf16.gmra.mrb[0].mxu0 %v1070
  %v1106 = vpop.f32.mrb[0].mxu0
  %v1107 = vadd.f32 0.0, %v1106
  %v1108 = vpop.f32.mrb[0].mxu0
  %v1109 = vpop.f32.mrb[0].mxu0
  %v1110 = vpop.f32.mrb[0].mxu0
  %1111 = vdwg.mxu0
  %v1112 = vadd.f32 %v1064, %v1107
  %s1113 = scalar_lea.vmem %s44, 2
  %v1114 = vld [vmem:[%s1113] sm:$0x3]
  %v1115 = vpack.c.bf16 %v1050, %v1050
  %1117 = vrot.lane.b32.xlu0 %v1115, 32
  %v1118 = vpop.permute.xlu0 %1117
  %v1120 = vsel %vm91, %v1118, 0
  %1122 = vmatprep.subr.bf16.mxu0 0
  %1123 = vmatpush1.bf16.msra.mxu0 %v147
  %1124 = vmatprep.subr.bf16.mxu0 0
  %1125 = vmatpush1.bf16.msra.mxu0 %v148
  %1126 = vmatprep.subr.bf16.mxu0 0
  %1127 = vmatpush1.bf16.msra.mxu0 0
  %1128 = vmatprep.subr.bf16.mxu0 0
  %1129 = vmatpush1.bf16.msra.mxu0 0
  %1130 = vmatprep.subr.bf16.mxu0 0
  %1131 = vmatpush1.bf16.msra.mxu0 0
  %1132 = vmatprep.subr.bf16.mxu0 0
  %1133 = vmatpush1.bf16.msra.mxu0 0
  %1134 = vmatprep.subr.bf16.mxu0 0
  %1135 = vmatpush1.bf16.msra.mxu0 0
  %1136 = vmatprep.subr.bf16.mxu0 0
  %1137 = vmatpush1.bf16.msra.mxu0 0
  %1138 = vmatprep.subr.bf16.mxu0 0
  %1139 = vmatpush1.bf16.msra.mxu0 0
  %1140 = vmatprep.subr.bf16.mxu0 0
  %1141 = vmatpush1.bf16.msra.mxu0 0
  %1142 = vmatprep.subr.bf16.mxu0 0
  %1143 = vmatpush1.bf16.msra.mxu0 0
  %1144 = vmatprep.subr.bf16.mxu0 0
  %1145 = vmatpush1.bf16.msra.mxu0 0
  %1146 = vmatprep.subr.bf16.mxu0 0
  %1147 = vmatpush1.bf16.msra.mxu0 0
  %1148 = vmatprep.subr.bf16.mxu0 0
  %1149 = vmatpush1.bf16.msra.mxu0 0
  %1150 = vmatprep.subr.bf16.mxu0 0
  %1151 = vmatpush1.bf16.msra.mxu0 0
  %1152 = vmatprep.subr.bf16.mxu0 0
  %1153 = vmatpush1.bf16.msra.mxu0 0
  %1154 = vmatprep.mubr.bf16.mxu0 0
  %1155 = vmatmul.mubr.bf16.gmra.mrb[0].mxu0 %v1120
  %v1156 = vpop.f32.mrb[0].mxu0
  %v1157 = vadd.f32 0.0, %v1156
  %v1158 = vpop.f32.mrb[0].mxu0
  %v1159 = vpop.f32.mrb[0].mxu0
  %v1160 = vpop.f32.mrb[0].mxu0
  %1161 = vdwg.mxu0
  %v1162 = vadd.f32 %v1114, %v1157
  %v1163 = vxor.u32 %v1112, 2147483648
  %v1164 = vmul.f32 %v1163, 1.442695
  %v1165 = vpow.pop %v1164
  %v1166 = vadd.f32 %v1165, 1.0
  %v1167 = vrcp.pop %v1166
  %v1168 = vmul.f32 1.0, %v1167
  %v1169 = vtanh.pop %v1112
  %v1170 = vmul.f32 %v1168, %v1020
  %1172 = vrot.lane.b32.xlu0 %v1169, 64
  %v1173 = vpop.permute.xlu0 %1172
  %v1175 = vmul.f32 %v1168, %v1173
  %1177 = vrot.lane.b32.xlu0 %v1175, 32
  %v1178 = vpop.permute.xlu0 %1177
  %v1180 = vadd.f32 %v1170, %v1178
  %v1181 = vtanh.pop %v1180
  %1183 = vrot.lane.b32.xlu0 %v1181, 64
  %v1184 = vpop.permute.xlu0 %1183
  %v1186 = vmul.f32 %v1168, %v1184
  %v1187 = vxor.u32 %v1162, 2147483648
  %v1188 = vmul.f32 %v1187, 1.442695
  %v1189 = vpow.pop %v1188
  %v1190 = vadd.f32 %v1189, 1.0
  %v1191 = vrcp.pop %v1190
  %v1192 = vmul.f32 1.0, %v1191
  %v1193 = vtanh.pop %v1162
  %v1194 = vmul.f32 %v1192, %v1044
  %1196 = vrot.lane.b32.xlu0 %v1193, 64
  %v1197 = vpop.permute.xlu0 %1196
  %v1199 = vmul.f32 %v1192, %v1197
  %1201 = vrot.lane.b32.xlu0 %v1199, 32
  %v1202 = vpop.permute.xlu0 %1201
  %v1204 = vadd.f32 %v1194, %v1202
  %v1205 = vtanh.pop %v1204
  %1207 = vrot.lane.b32.xlu0 %v1205, 64
  %v1208 = vpop.permute.xlu0 %1207
  %v1210 = vmul.f32 %v1192, %v1208
  %1212 = vrot.lane.b32.xlu0 %v1186, 32
  %v1213 = vpop.permute.xlu0 %1212
  %s1215 = scalar_lea.vmem %s4, 12
  %1216 = vst.msk [vmem:[%s1215] sm:$0x3] %vm255, %v1213
  %1218 = vrot.lane.b32.xlu0 %v1210, 32
  %v1219 = vpop.permute.xlu0 %1218
  %s1221 = scalar_lea.vmem %s52, 2
  %1222 = vst.msk [vmem:[%s1221] sm:$0x3] %vm255, %v1219
  %s1223 = scalar_lea.vmem %s0, 14
  %v1224 = vld [vmem:[%s1223] sm:$0x3]
  %v1225 = vpack.c.bf16 %v1186, %v1186
  %1227 = vrot.lane.b32.xlu0 %v1225, 32
  %v1228 = vpop.permute.xlu0 %1227
  %v1230 = vsel %vm91, %v1228, 0
  %1232 = vmatprep.subr.bf16.mxu0 0
  %1233 = vmatpush1.bf16.msra.mxu0 %v87
  %1234 = vmatprep.subr.bf16.mxu0 0
  %1235 = vmatpush1.bf16.msra.mxu0 %v88
  %1236 = vmatprep.subr.bf16.mxu0 0
  %1237 = vmatpush1.bf16.msra.mxu0 0
  %1238 = vmatprep.subr.bf16.mxu0 0
  %1239 = vmatpush1.bf16.msra.mxu0 0
  %1240 = vmatprep.subr.bf16.mxu0 0
  %1241 = vmatpush1.bf16.msra.mxu0 0
  %1242 = vmatprep.subr.bf16.mxu0 0
  %1243 = vmatpush1.bf16.msra.mxu0 0
  %1244 = vmatprep.subr.bf16.mxu0 0
  %1245 = vmatpush1.bf16.msra.mxu0 0
  %1246 = vmatprep.subr.bf16.mxu0 0
  %1247 = vmatpush1.bf16.msra.mxu0 0
  %1248 = vmatprep.subr.bf16.mxu0 0
  %1249 = vmatpush1.bf16.msra.mxu0 0
  %1250 = vmatprep.subr.bf16.mxu0 0
  %1251 = vmatpush1.bf16.msra.mxu0 0
  %1252 = vmatprep.subr.bf16.mxu0 0
  %1253 = vmatpush1.bf16.msra.mxu0 0
  %1254 = vmatprep.subr.bf16.mxu0 0
  %1255 = vmatpush1.bf16.msra.mxu0 0
  %1256 = vmatprep.subr.bf16.mxu0 0
  %1257 = vmatpush1.bf16.msra.mxu0 0
  %1258 = vmatprep.subr.bf16.mxu0 0
  %1259 = vmatpush1.bf16.msra.mxu0 0
  %1260 = vmatprep.subr.bf16.mxu0 0
  %1261 = vmatpush1.bf16.msra.mxu0 0
  %1262 = vmatprep.subr.bf16.mxu0 0
  %1263 = vmatpush1.bf16.msra.mxu0 0
  %1264 = vmatprep.mubr.bf16.mxu0 0
  %1265 = vmatmul.mubr.bf16.gmra.mrb[0].mxu0 %v1230
  %v1266 = vpop.f32.mrb[0].mxu0
  %v1267 = vadd.f32 0.0, %v1266
  %v1268 = vpop.f32.mrb[0].mxu0
  %v1269 = vpop.f32.mrb[0].mxu0
  %v1270 = vpop.f32.mrb[0].mxu0
  %1271 = vdwg.mxu0
  %v1272 = vadd.f32 %v1224, %v1267
  %v1273 = vld [vmem:[%s44] sm:$0x3]
  %v1274 = vpack.c.bf16 %v1210, %v1210
  %1276 = vrot.lane.b32.xlu0 %v1274, 32
  %v1277 = vpop.permute.xlu0 %1276
  %v1279 = vsel %vm91, %v1277, 0
  %1281 = vmatprep.subr.bf16.mxu0 0
  %1282 = vmatpush1.bf16.msra.mxu0 %v147
  %1283 = vmatprep.subr.bf16.mxu0 0
  %1284 = vmatpush1.bf16.msra.mxu0 %v148
  %1285 = vmatprep.subr.bf16.mxu0 0
  %1286 = vmatpush1.bf16.msra.mxu0 0
  %1287 = vmatprep.subr.bf16.mxu0 0
  %1288 = vmatpush1.bf16.msra.mxu0 0
  %1289 = vmatprep.subr.bf16.mxu0 0
  %1290 = vmatpush1.bf16.msra.mxu0 0
  %1291 = vmatprep.subr.bf16.mxu0 0
  %1292 = vmatpush1.bf16.msra.mxu0 0
  %1293 = vmatprep.subr.bf16.mxu0 0
  %1294 = vmatpush1.bf16.msra.mxu0 0
  %1295 = vmatprep.subr.bf16.mxu0 0
  %1296 = vmatpush1.bf16.msra.mxu0 0
  %1297 = vmatprep.subr.bf16.mxu0 0
  %1298 = vmatpush1.bf16.msra.mxu0 0
  %1299 = vmatprep.subr.bf16.mxu0 0
  %1300 = vmatpush1.bf16.msra.mxu0 0
  %1301 = vmatprep.subr.bf16.mxu0 0
  %1302 = vmatpush1.bf16.msra.mxu0 0
  %1303 = vmatprep.subr.bf16.mxu0 0
  %1304 = vmatpush1.bf16.msra.mxu0 0
  %1305 = vmatprep.subr.bf16.mxu0 0
  %1306 = vmatpush1.bf16.msra.mxu0 0
  %1307 = vmatprep.subr.bf16.mxu0 0
  %1308 = vmatpush1.bf16.msra.mxu0 0
  %1309 = vmatprep.subr.bf16.mxu0 0
  %1310 = vmatpush1.bf16.msra.mxu0 0
  %1311 = vmatprep.subr.bf16.mxu0 0
  %1312 = vmatpush1.bf16.msra.mxu0 0
  %1313 = vmatprep.mubr.bf16.mxu0 0
  %1314 = vmatmul.mubr.bf16.gmra.mrb[0].mxu0 %v1279
  %v1315 = vpop.f32.mrb[0].mxu0
  %v1316 = vadd.f32 0.0, %v1315
  %v1317 = vpop.f32.mrb[0].mxu0
  %v1318 = vpop.f32.mrb[0].mxu0
  %v1319 = vpop.f32.mrb[0].mxu0
  %1320 = vdwg.mxu0
  %v1321 = vadd.f32 %v1273, %v1316
  %v1322 = vxor.u32 %v1272, 2147483648
  %v1323 = vmul.f32 %v1322, 1.442695
  %v1324 = vpow.pop %v1323
  %v1325 = vadd.f32 %v1324, 1.0
  %v1326 = vrcp.pop %v1325
  %v1327 = vmul.f32 1.0, %v1326
  %v1328 = vtanh.pop %v1272
  %v1329 = vmul.f32 %v1327, %v1180
  %1331 = vrot.lane.b32.xlu0 %v1328, 64
  %v1332 = vpop.permute.xlu0 %1331
  %v1334 = vmul.f32 %v1327, %v1332
  %1336 = vrot.lane.b32.xlu0 %v1334, 32
  %v1337 = vpop.permute.xlu0 %1336
  %v1339 = vadd.f32 %v1329, %v1337
  %v1340 = vtanh.pop %v1339
  %1342 = vrot.lane.b32.xlu0 %v1340, 64
  %v1343 = vpop.permute.xlu0 %1342
  %v1345 = vmul.f32 %v1327, %v1343
  %v1346 = vxor.u32 %v1321, 2147483648
  %v1347 = vmul.f32 %v1346, 1.442695
  %v1348 = vpow.pop %v1347
  %v1349 = vadd.f32 %v1348, 1.0
  %v1350 = vrcp.pop %v1349
  %v1351 = vmul.f32 1.0, %v1350
  %v1352 = vtanh.pop %v1321
  %v1353 = vmul.f32 %v1351, %v1204
  %1355 = vrot.lane.b32.xlu0 %v1352, 64
  %v1356 = vpop.permute.xlu0 %1355
  %v1358 = vmul.f32 %v1351, %v1356
  %1360 = vrot.lane.b32.xlu0 %v1358, 32
  %v1361 = vpop.permute.xlu0 %1360
  %v1363 = vadd.f32 %v1353, %v1361
  %v1364 = vtanh.pop %v1363
  %1366 = vrot.lane.b32.xlu0 %v1364, 64
  %v1367 = vpop.permute.xlu0 %1366
  %v1369 = vmul.f32 %v1351, %v1367
  %1371 = vrot.lane.b32.xlu0 %v1345, 32
  %v1372 = vpop.permute.xlu0 %1371
  %s1374 = scalar_lea.vmem %s4, 14
  %1375 = vst.msk [vmem:[%s1374] sm:$0x3] %vm255, %v1372
  %1377 = vrot.lane.b32.xlu0 %v1369, 32
  %v1378 = vpop.permute.xlu0 %1377
  %1380 = vst.msk [vmem:[%s52] sm:$0x3] %vm255, %v1378
  %1381 = vst.msk [vmem:[#allocation2] sm:$0x3] %vm255, %v1372
  %1383 = vrot.lane.b32.xlu0 %v1339, 96
  %v1384 = vpop.permute.xlu0 %1383
  %1386 = vst.msk [vmem:[#allocation3] sm:$0x3] %vm255, %v1384
  %1387 = vst.msk [vmem:[#allocation4] sm:$0x3] %vm255, %v1378
  %1389 = vrot.lane.b32.xlu0 %v1363, 96
  %v1390 = vpop.permute.xlu0 %1389
  %1392 = vst.msk [vmem:[#allocation5] sm:$0x3] %vm255, %v1390
  %s1393 = ssub.s32 0, 0
  %s1394 = smul.u32 8, %s1393
  %p1395 = scmp.lt.s32.totalorder %s1394, 7
  %s1396 = scalar_select %p1395, %s1394, 7
  %s1397 = smul.addr %s1396, 2
  %s1398 = scalar_lea.vmem %s5, %s1397
  // Predicated region
  $region22: #{_lambda_.3} parent=0 // pred_check
    _
  $region23: #{_lambda_.3} parent=0 // pred_check_branch
    %1400 = sbr.rel (0) target = $region25
  $region24: #{_lambda_.3} parent=0 // pred_region
    _
  $region25: #{_lambda_.3} parent=0 // pred_fallthru
    _
  // Predicated region
  $region26: #{_lambda_.3} parent=0 // pred_check
    _
  $region27: #{_lambda_.3} parent=0 // pred_check_branch
    %1402 = sbr.rel (0) target = $region29
  $region28: #{_lambda_.3} parent=0 // pred_region
    %s1403 = ssub.s32 0, 0
    %s1404 = smul.u32 8, %s1403
  $region29: #{_lambda_.3} parent=0 // pred_fallthru
    _
  // Predicated region
  $region30: #{_lambda_.3} parent=0 // pred_check
    _
  $region31: #{_lambda_.3} parent=0 // pred_check_branch
    %1406 = sbr.rel (0) target = $region33
  $region32: #{_lambda_.3} parent=0 // pred_region
    _
  $region33: #{_lambda_.3} parent=0 // pred_fallthru
    _
  // Predicated region
  $region34: #{_lambda_.3} parent=0 // pred_check
    _
  $region35: #{_lambda_.3} parent=0 // pred_check_branch
    %1408 = sbr.rel (0) target = $region37
  $region36: #{_lambda_.3} parent=0 // pred_region
    %s1409 = ssub.s32 0, 0
    %s1410 = smul.u32 8, %s1409
    %p1411 = scmp.lt.s32.totalorder %s1410, 7
    %s1412 = scalar_select %p1411, %s1410, 7
    %s1413 = smul.addr %s1412, 2
    %s1414 = scalar_lea.vmem %s5, %s1413
  $region37: #{_lambda_.3} parent=0 // pred_fallthru
    _

</llo_original>
